<compile_context>
chip_gen: v6e
topology: v6e:2x2x1
jax: 0.10.0
libtpu: 0.0.40
codegen_flags: <defaults>
</compile_context>

<pallas_src>
import functools

import jax
import jax.numpy as jnp
from jax import lax
from jax.experimental import pallas as pl
from jax.experimental.pallas import tpu as pltpu


def _elu_plus_one(x):
    # elu(x, alpha=1) + 1  ==  x + 1 (x > 0)  else exp(x).
    # Clamp the exp argument so the discarded positive lane never overflows.
    return jnp.where(x > 0, x + 1.0, jnp.exp(jnp.minimum(x, 0.0)))


def _rcla_kernel(*refs, eps, seq_len, s_tile, mxu_dtype, has_mask, ragged):
    # refs (has_mask):   q, k, v, mask, V_out, S_out, Z_out
    # refs (no mask):    q, k, v,       V_out, S_out, Z_out
    #   q_ref    : (1, n_tile, D)
    #   k_ref    : (1, s_tile, n_tile, D)   native layout / native dtype
    #   v_ref    : (1, s_tile, n_tile, M)   native layout / native dtype
    #   mask_ref : (1, s_tile, 1)           float {0,1}, 1.0 => masked out
    #   vout_ref : (1, n_tile, M)
    #   sout_ref : (1, n_tile, M, D)  f32, resident across the S grid axis
    #   zout_ref : (1, n_tile, D)     f32, resident across the S grid axis
    if has_mask:
        q_ref, k_ref, v_ref, mask_ref, vout_ref, sout_ref, zout_ref = refs
    else:
        q_ref, k_ref, v_ref, vout_ref, sout_ref, zout_ref = refs
        mask_ref = None

    s_idx = pl.program_id(2)

    @pl.when(s_idx == 0)
    def _init():
        sout_ref[...] = jnp.zeros_like(sout_ref)
        zout_ref[...] = jnp.zeros_like(zout_ref)

    k = k_ref[0]                               # (s_tile, n_tile, D)
    v = v_ref[0].astype(mxu_dtype)             # (s_tile, n_tile, M)

    Kf = _elu_plus_one(k.astype(jnp.float32))  # feature_map.forward_keys (f32)

    if has_mask:
        m = mask_ref[0]                        # (s_tile, 1)
        Kf = jnp.where(m[:, :, None] > 0.5, 0.0, Kf)   # masked_fill(key_mask, 0)

    if ragged:
        # Final S tile runs past seq_len (no jnp.pad of K/V in the wrapper):
        # zero the feature map AND the value rows so stale/OOB tile contents
        # cannot contribute (0 * garbage via select, not multiply).
        pos = s_idx * s_tile + lax.broadcasted_iota(jnp.int32, (s_tile, 1, 1), 0)
        valid = pos < seq_len
        Kf = jnp.where(valid, Kf, 0.0)
        v = jnp.where(valid, v, jnp.zeros_like(v))

    # Z[n, d] += sum_s Kf[s, n, d]
    zout_ref[0] += jnp.sum(Kf, axis=0)

    # S[n, m, d] += sum_s v[s, n, m] * Kf[s, n, d]   (torch: 'bsnd,bsnm->bnmd')
    # One batched MXU contraction over all heads in the tile, f32 accumulation
    # directly into the resident output block.
    v_t = jnp.swapaxes(v, 0, 1)                          # (n_tile, s_tile, M)
    kf_t = jnp.swapaxes(Kf.astype(mxu_dtype), 0, 1)      # (n_tile, s_tile, D)
    # TODO(synk): pack several heads into one (s, n_pack*M) x (s, n_pack*D)
    # matmul (diagonal-block extraction) to better fill the 256x256 MXU on
    # v6e/v7x; left out to keep the lowering simple.
    sout_ref[0] += lax.dot_general(
        v_t, kf_t,
        dimension_numbers=(((1,), (1,)), ((0,), (0,))),  # batch n, contract s
        preferred_element_type=jnp.float32)              # (n_tile, M, D)

    @pl.when(s_idx == pl.num_programs(2) - 1)
    def _finalize():
        q = q_ref[0].astype(jnp.float32)                 # (n_tile, D)
        Qf = _elu_plus_one(q)                            # forward_queries
        S_state = sout_ref[0]                            # (n_tile, M, D) f32
        Z_state = zout_ref[0]                            # (n_tile, D)    f32
        denom = jnp.sum(Qf * Z_state, axis=-1, keepdims=True) + eps   # (n, 1)
        inv = pl.reciprocal(denom, approx=False)
        Vo = jnp.sum(Qf[:, None, :] * S_state, axis=-1) * inv         # (n, M)
        vout_ref[0] = Vo.astype(vout_ref.dtype)


def _default_mxu_dtype(*dtypes):
    # Feed the MXU bf16 only when the inputs are already sub-32-bit, so f32
    # inputs keep exact f32 numerics vs. the torch reference.
    for dt in dtypes:
        if jnp.dtype(dt).itemsize < 4:
            return jnp.bfloat16
    return jnp.float32


def _vmem_limit_bytes():
    # ~half of physical VMEM: 64 MiB on v5e/v6e (128 MiB), 32 MiB on v7x (64 MiB).
    cap = None
    try:
        cap = getattr(pltpu.get_tpu_info(), "vmem_capacity_bytes", None)
    except Exception:
        cap = None
    if not cap:
        cap = 128 * 1024 * 1024
    return int(cap) // 2


def recurrent_cross_linear_attention(query, key, value, key_mask=None, eps=1e-6,
                                     s_tile_target=512, mxu_dtype=None):
    """Pallas TPU implementation of RecurrentCrossLinearAttention.forward (info=None).

    query: (B, N, D)   key: (B, S, N, D)   value: (B, S, N, M)
    key_mask: optional (B, S) bool, True => mask that key position out.
    Returns (V, (S, Z)): V (B, N, M) in query dtype, S (B, N, M, D) f32, Z (B, N, D) f32.
    """
    # TODO(synk): the info=(S, Z)-provided recurrent-step path (skips rebuilding
    # S/Z) is a trivial einsum and is not ported to Pallas.
    B, S_len, N, D = key.shape
    M = value.shape[-1]
    assert query.shape == (B, N, D)
    assert value.shape == (B, S_len, N, M)

    if mxu_dtype is None:
        mxu_dtype = _default_mxu_dtype(key.dtype, value.dtype)

    # Sequence tiling: full S if small, else s_tile_target; a ragged tail is
    # masked in-kernel (no jnp.pad re-materialisation of key/value).
    s_tile = S_len if S_len <= s_tile_target else int(s_tile_target)
    s_blocks = -(-S_len // s_tile)
    ragged = (S_len % s_tile) != 0

    # Head tiling: keep the full head dim per block so each S-tile DMA is one
    # contiguous HBM run.  Split heads only when B == 1 so both v7x TensorCores
    # get a "parallel" block (n_tile must stay a multiple of 8).
    if B == 1 and N % 16 == 0:
        n_tile = N // 2
    else:
        n_tile = N
    n_blocks = N // n_tile

    has_mask = key_mask is not None

    args = [query, key, value]
    in_specs = [
        pl.BlockSpec((1, n_tile, D), lambda b, n, s: (b, n, 0)),
        pl.BlockSpec((1, s_tile, n_tile, D), lambda b, n, s: (b, s, n, 0)),
        pl.BlockSpec((1, s_tile, n_tile, M), lambda b, n, s: (b, s, n, 0)),
    ]
    if has_mask:
        mask_f = key_mask.astype(jnp.float32).reshape(B, S_len, 1)
        args.append(mask_f)
        in_specs.append(pl.BlockSpec((1, s_tile, 1), lambda b, n, s: (b, s, 0)))

    out_shapes = (
        jax.ShapeDtypeStruct((B, N, M), query.dtype),      # V
        jax.ShapeDtypeStruct((B, N, M, D), jnp.float32),   # S (state, f32)
        jax.ShapeDtypeStruct((B, N, D), jnp.float32),      # Z (state, f32)
    )
    out_specs = (
        pl.BlockSpec((1, n_tile, M), lambda b, n, s: (b, n, 0)),
        pl.BlockSpec((1, n_tile, M, D), lambda b, n, s: (b, n, 0, 0)),
        pl.BlockSpec((1, n_tile, D), lambda b, n, s: (b, n, 0)),
    )

    kernel = functools.partial(
        _rcla_kernel, eps=eps, seq_len=S_len, s_tile=s_tile,
        mxu_dtype=mxu_dtype, has_mask=has_mask, ragged=ragged)

    V_out, S_out, Z_out = pl.pallas_call(
        kernel,
        out_shape=out_shapes,
        grid=(B, n_blocks, s_blocks),
        in_specs=in_specs,
        out_specs=out_specs,
        compiler_params=pltpu.CompilerParams(
            dimension_semantics=("parallel", "parallel", "arbitrary"),
            vmem_limit_bytes=_vmem_limit_bytes(),
        ),
    )(*args)

    return V_out, (S_out, Z_out)


def _reference(query, key, value, key_mask=None, eps=1e-6):
    """Pure-JAX mirror of the PyTorch forward (info=None)."""
    Q = _elu_plus_one(query)
    K = _elu_plus_one(key)
    if key_mask is not None:
        K = jnp.where(key_mask[:, :, None, None], 0.0, K)
    S = jnp.einsum('bsnd,bsnm->bnmd', K, value)
    Z = K.sum(axis=1)
    QZ = 1.0 / (jnp.einsum('bnd,bnd->bn', Q, Z) + eps)
    V = jnp.einsum('bnd,bnmd,bn->bnm', Q, S, QZ)
    return V, (S, Z)


def _check(out, ref):
    for a, b in zip(out, ref):
        assert jnp.allclose(a, b, atol=1e-4, rtol=1e-4)


if __name__ == "__main__":
    B, S_len, N, D, M = 2, 8, 4, 32, 32
    k0, k1, k2 = jax.random.split(jax.random.PRNGKey(0), 3)

    query = jax.random.normal(k0, (B, N, D), dtype=jnp.float32)
    key = jax.random.normal(k1, (B, S_len, N, D), dtype=jnp.float32)
    value = jax.random.normal(k2, (B, S_len, N, M), dtype=jnp.float32)
    # mask out the last two key positions of every batch element
    key_mask = jnp.broadcast_to(jnp.arange(S_len)[None, :] >= (S_len - 2), (B, S_len))

    # masked path
    V, (S, Z) = recurrent_cross_linear_attention(query, key, value, key_mask=key_mask)
    jax.block_until_ready((V, S, Z))
    V_r, (S_r, Z_r) = _reference(query, key, value, key_mask=key_mask)
    _check((V, S, Z), (V_r, S_r, Z_r))

    # unmasked path (mask input / select compiled out)
    V2, (S2, Z2) = recurrent_cross_linear_attention(query, key, value)
    jax.block_until_ready((V2, S2, Z2))
    V2_r, (S2_r, Z2_r) = _reference(query, key, value)
    _check((V2, S2, Z2), (V2_r, S2_r, Z2_r))

    # ragged S path (S not a multiple of s_tile) with a mask: no K/V padding,
    # tail handled in-kernel with an iota validity mask.
    S3_len = 12
    k3, k4 = jax.random.split(jax.random.PRNGKey(1), 2)
    key3 = jax.random.normal(k3, (B, S3_len, N, D), dtype=jnp.float32)
    value3 = jax.random.normal(k4, (B, S3_len, N, M), dtype=jnp.float32)
    mask3 = jnp.broadcast_to(jnp.arange(S3_len)[None, :] >= (S3_len - 3), (B, S3_len))
    V3, (S3, Z3) = recurrent_cross_linear_attention(
        query, key3, value3, key_mask=mask3, s_tile_target=8)
    jax.block_until_ready((V3, S3, Z3))
    V3_r, (S3_r, Z3_r) = _reference(query, key3, value3, key_mask=mask3)
    _check((V3, S3, Z3), (V3_r, S3_r, Z3_r))

    print("KERNEL_OK")
</pallas_src>

<mosaic_0001>
module attributes {stable_mosaic.version = 11 : i64} {
  func.func @_rcla_kernel(%arg0: i32, %arg1: i32, %arg2: i32, %arg3: memref<1x4x32xf32, #tpu.memory_space<vmem>>, %arg4: memref<1x8x4x32xf32, #tpu.memory_space<vmem>>, %arg5: memref<1x8x4x32xf32, #tpu.memory_space<vmem>>, %arg6: memref<1x8x1xf32, #tpu.memory_space<vmem>>, %arg7: memref<1x4x32xf32, #tpu.memory_space<vmem>>, %arg8: memref<1x4x32x32xf32, #tpu.memory_space<vmem>>, %arg9: memref<1x4x32xf32, #tpu.memory_space<vmem>>) attributes {dimension_semantics = [#tpu.dimension_semantics<parallel>, #tpu.dimension_semantics<parallel>, #tpu.dimension_semantics<arbitrary>], iteration_bounds = array<i64: 2, 1, 1>, scalar_prefetch = 0 : i64, scratch_operands = 0 : i64, tpu.core_type = #tpu.core_type<tc>, window_params = [{transform_indices = @transform_0, window_bounds = array<i64: 1, 4, 32>}, {transform_indices = @transform_1, window_bounds = array<i64: 1, 8, 4, 32>}, {transform_indices = @transform_2, window_bounds = array<i64: 1, 8, 4, 32>}, {transform_indices = @transform_3, window_bounds = array<i64: 1, 8, 1>}, {transform_indices = @transform_4, window_bounds = array<i64: 1, 4, 32>}, {transform_indices = @transform_5, window_bounds = array<i64: 1, 4, 32, 32>}, {transform_indices = @transform_6, window_bounds = array<i64: 1, 4, 32>}]} {
    %c0_i32 = arith.constant 0 : i32
    %0 = arith.cmpi eq, %arg2, %c0_i32 : i32
    %1 = arith.extui %0 : i1 to i32
    %c0_i32_0 = arith.constant 0 : i32
    %2 = arith.cmpi ne, %1, %c0_i32_0 : i32
    scf.if %2 {
      %cst_33 = arith.constant 0.000000e+00 : f32
      %43 = vector.broadcast %cst_33 : f32 to vector<1x4x32x32xf32>
      %c0_34 = arith.constant 0 : index
      %c0_35 = arith.constant 0 : index
      %c0_36 = arith.constant 0 : index
      %c0_37 = arith.constant 0 : index
      %44 = vector.load %arg8[%c0_34, %c0_35, %c0_36, %c0_37] : memref<1x4x32x32xf32, #tpu.memory_space<vmem>>, vector<1x4x32x32xf32>
      tpu.vector_store %arg8[%c0_34, %c0_35, %c0_36, %c0_37], %43 {strides = array<i32>} : memref<1x4x32x32xf32, #tpu.memory_space<vmem>>, vector<1x4x32x32xf32>,
      %cst_38 = arith.constant 0.000000e+00 : f32
      %45 = vector.broadcast %cst_38 : f32 to vector<1x4x32xf32>
      %c0_39 = arith.constant 0 : index
      %c0_40 = arith.constant 0 : index
      %c0_41 = arith.constant 0 : index
      %46 = vector.load %arg9[%c0_39, %c0_40, %c0_41] : memref<1x4x32xf32, #tpu.memory_space<vmem>>, vector<1x4x32xf32>
      tpu.vector_store %arg9[%c0_39, %c0_40, %c0_41], %45 {strides = array<i32>} : memref<1x4x32xf32, #tpu.memory_space<vmem>>, vector<1x4x32xf32>,
    } else {
    }
    %c0 = arith.constant 0 : index
    %c0_1 = arith.constant 0 : index
    %c0_2 = arith.constant 0 : index
    %c0_3 = arith.constant 0 : index
    %3 = vector.load %arg4[%c0, %c0_1, %c0_2, %c0_3] : memref<1x8x4x32xf32, #tpu.memory_space<vmem>>, vector<1x8x4x32xf32>
    %4 = vector.shape_cast %3 : vector<1x8x4x32xf32> to vector<8x4x32xf32>
    %c0_4 = arith.constant 0 : index
    %c0_5 = arith.constant 0 : index
    %c0_6 = arith.constant 0 : index
    %c0_7 = arith.constant 0 : index
    %5 = vector.load %arg5[%c0_4, %c0_5, %c0_6, %c0_7] : memref<1x8x4x32xf32, #tpu.memory_space<vmem>>, vector<1x8x4x32xf32>
    %6 = vector.shape_cast %5 : vector<1x8x4x32xf32> to vector<8x4x32xf32>
    %cst = arith.constant 0.000000e+00 : f32
    %7 = vector.broadcast %cst : f32 to vector<8x4x32xf32>
    %8 = arith.cmpf ogt, %4, %7 : vector<8x4x32xf32>
    %cst_8 = arith.constant 1.000000e+00 : f32
    %9 = vector.broadcast %cst_8 : f32 to vector<8x4x32xf32>
    %10 = arith.addf %4, %9 : vector<8x4x32xf32>
    %cst_9 = arith.constant 0.000000e+00 : f32
    %11 = vector.broadcast %cst_9 : f32 to vector<8x4x32xf32>
    %12 = arith.minimumf %4, %11 : vector<8x4x32xf32>
    %13 = math.exp %12 : vector<8x4x32xf32>
    %14 = arith.select %8, %10, %13 : vector<8x4x32xi1>, vector<8x4x32xf32>
    %c0_10 = arith.constant 0 : index
    %c0_11 = arith.constant 0 : index
    %c0_12 = arith.constant 0 : index
    %15 = vector.load %arg6[%c0_10, %c0_11, %c0_12] : memref<1x8x1xf32, #tpu.memory_space<vmem>>, vector<1x8x1xf32>
    %16 = vector.shape_cast %15 : vector<1x8x1xf32> to vector<8x1xf32>
    %17 = vector.shape_cast %16 : vector<8x1xf32> to vector<8x1x1xf32>
    %cst_13 = arith.constant 5.000000e-01 : f32
    %18 = vector.broadcast %cst_13 : f32 to vector<8x1x1xf32>
    %19 = arith.cmpf ogt, %17, %18 : vector<8x1x1xf32>
    %cst_14 = arith.constant 0.000000e+00 : f32
    %20 = vector.shape_cast %19 : vector<8x1x1xi1> to vector<8x1x1xi1>
    %21 = vector.broadcast %20 : vector<8x1x1xi1> to vector<8x4x32xi1>
    %22 = vector.broadcast %cst_14 : f32 to vector<8x4x32xf32>
    %23 = arith.select %21, %22, %14 : vector<8x4x32xi1>, vector<8x4x32xf32>
    %c0_15 = arith.constant 0 : index
    %c0_16 = arith.constant 0 : index
    %c0_17 = arith.constant 0 : index
    %24 = vector.load %arg9[%c0_15, %c0_16, %c0_17] : memref<1x4x32xf32, #tpu.memory_space<vmem>>, vector<1x4x32xf32>
    %25 = vector.shape_cast %24 : vector<1x4x32xf32> to vector<4x32xf32>
    %cst_18 = arith.constant dense<0.000000e+00> : vector<4x32xf32>
    %26 = vector.multi_reduction <add>, %23, %cst_18 [0] : vector<8x4x32xf32> to vector<4x32xf32>
    %27 = arith.addf %25, %26 : vector<4x32xf32>
    %c0_19 = arith.constant 0 : index
    %c0_20 = arith.constant 0 : index
    %c0_21 = arith.constant 0 : index
    %28 = vector.load %arg9[%c0_19, %c0_20, %c0_21] : memref<1x4x32xf32, #tpu.memory_space<vmem>>, vector<1x4x32xf32>
    %29 = vector.shape_cast %28 : vector<1x4x32xf32> to vector<4x32xf32>
    %30 = vector.shape_cast %27 : vector<4x32xf32> to vector<1x4x32xf32>
    tpu.vector_store %arg9[%c0_19, %c0_20, %c0_21], %30 {strides = array<i32>} : memref<1x4x32xf32, #tpu.memory_space<vmem>>, vector<1x4x32xf32>,
    %31 = tpu.transpose %6, [1, 0, 2] : vector<8x4x32xf32> -> vector<4x8x32xf32>
    %32 = tpu.transpose %23, [1, 0, 2] : vector<8x4x32xf32> -> vector<4x8x32xf32>
    %c0_22 = arith.constant 0 : index
    %c0_23 = arith.constant 0 : index
    %c0_24 = arith.constant 0 : index
    %c0_25 = arith.constant 0 : index
    %33 = vector.load %arg8[%c0_22, %c0_23, %c0_24, %c0_25] : memref<1x4x32x32xf32, #tpu.memory_space<vmem>>, vector<1x4x32x32xf32>
    %34 = vector.shape_cast %33 : vector<1x4x32x32xf32> to vector<4x32x32xf32>
    %cst_26 = arith.constant dense<0.000000e+00> : vector<4x32x32xf32>
    %35 = tpu.matmul %31, %32, %cst_26 {dimension_numbers = #tpu.dot_dimension_numbers<[1], [1], [2], [2], [0, 0, 0, 2, 1, 2], [0], [0]>} : vector<4x8x32xf32>, vector<4x8x32xf32>, vector<4x32x32xf32> -> vector<4x32x32xf32>
    %36 = arith.addf %34, %35 : vector<4x32x32xf32>
    %c0_27 = arith.constant 0 : index
    %c0_28 = arith.constant 0 : index
    %c0_29 = arith.constant 0 : index
    %c0_30 = arith.constant 0 : index
    %37 = vector.load %arg8[%c0_27, %c0_28, %c0_29, %c0_30] : memref<1x4x32x32xf32, #tpu.memory_space<vmem>>, vector<1x4x32x32xf32>
    %38 = vector.shape_cast %37 : vector<1x4x32x32xf32> to vector<4x32x32xf32>
    %39 = vector.shape_cast %36 : vector<4x32x32xf32> to vector<1x4x32x32xf32>
    tpu.vector_store %arg8[%c0_27, %c0_28, %c0_29, %c0_30], %39 {strides = array<i32>} : memref<1x4x32x32xf32, #tpu.memory_space<vmem>>, vector<1x4x32x32xf32>,
    %c0_i32_31 = arith.constant 0 : i32
    %40 = arith.cmpi eq, %arg2, %c0_i32_31 : i32
    %41 = arith.extui %40 : i1 to i32
    %c0_i32_32 = arith.constant 0 : i32
    %42 = arith.cmpi ne, %41, %c0_i32_32 : i32
    scf.if %42 {
      %c0_33 = arith.constant 0 : index
      %c0_34 = arith.constant 0 : index
      %c0_35 = arith.constant 0 : index
      %43 = vector.load %arg3[%c0_33, %c0_34, %c0_35] : memref<1x4x32xf32, #tpu.memory_space<vmem>>, vector<1x4x32xf32>
      %44 = vector.shape_cast %43 : vector<1x4x32xf32> to vector<4x32xf32>
      %cst_36 = arith.constant 0.000000e+00 : f32
      %45 = vector.broadcast %cst_36 : f32 to vector<4x32xf32>
      %46 = arith.cmpf ogt, %44, %45 : vector<4x32xf32>
      %cst_37 = arith.constant 1.000000e+00 : f32
      %47 = vector.broadcast %cst_37 : f32 to vector<4x32xf32>
      %48 = arith.addf %44, %47 : vector<4x32xf32>
      %cst_38 = arith.constant 0.000000e+00 : f32
      %49 = vector.broadcast %cst_38 : f32 to vector<4x32xf32>
      %50 = arith.minimumf %44, %49 : vector<4x32xf32>
      %51 = math.exp %50 : vector<4x32xf32>
      %52 = arith.select %46, %48, %51 : vector<4x32xi1>, vector<4x32xf32>
      %c0_39 = arith.constant 0 : index
      %c0_40 = arith.constant 0 : index
      %c0_41 = arith.constant 0 : index
      %c0_42 = arith.constant 0 : index
      %53 = vector.load %arg8[%c0_39, %c0_40, %c0_41, %c0_42] : memref<1x4x32x32xf32, #tpu.memory_space<vmem>>, vector<1x4x32x32xf32>
      %54 = vector.shape_cast %53 : vector<1x4x32x32xf32> to vector<4x32x32xf32>
      %c0_43 = arith.constant 0 : index
      %c0_44 = arith.constant 0 : index
      %c0_45 = arith.constant 0 : index
      %55 = vector.load %arg9[%c0_43, %c0_44, %c0_45] : memref<1x4x32xf32, #tpu.memory_space<vmem>>, vector<1x4x32xf32>
      %56 = vector.shape_cast %55 : vector<1x4x32xf32> to vector<4x32xf32>
      %57 = arith.mulf %52, %56 : vector<4x32xf32>
      %cst_46 = arith.constant dense<0.000000e+00> : vector<4xf32>
      %58 = vector.multi_reduction <add>, %57, %cst_46 [1] : vector<4x32xf32> to vector<4xf32>
      %59 = vector.shape_cast %58 : vector<4xf32> to vector<4x1xf32>
      %cst_47 = arith.constant 9.99999997E-7 : f32
      %60 = vector.broadcast %cst_47 : f32 to vector<4x1xf32>
      %61 = arith.addf %59, %60 : vector<4x1xf32>
      %62 = tpu.reciprocal %61 : vector<4x1xf32> -> vector<4x1xf32>
      %63 = vector.shape_cast %52 : vector<4x32xf32> to vector<4x1x32xf32>
      %64 = vector.broadcast %63 : vector<4x1x32xf32> to vector<4x32x32xf32>
      %65 = arith.mulf %64, %54 : vector<4x32x32xf32>
      %cst_48 = arith.constant dense<0.000000e+00> : vector<4x32xf32>
      %66 = vector.multi_reduction <add>, %65, %cst_48 [2] : vector<4x32x32xf32> to vector<4x32xf32>
      %67 = vector.broadcast %62 : vector<4x1xf32> to vector<4x32xf32>
      %68 = arith.mulf %66, %67 : vector<4x32xf32>
      %c0_49 = arith.constant 0 : index
      %c0_50 = arith.constant 0 : index
      %c0_51 = arith.constant 0 : index
      %69 = vector.load %arg7[%c0_49, %c0_50, %c0_51] : memref<1x4x32xf32, #tpu.memory_space<vmem>>, vector<1x4x32xf32>
      %70 = vector.shape_cast %69 : vector<1x4x32xf32> to vector<4x32xf32>
      %71 = vector.shape_cast %68 : vector<4x32xf32> to vector<1x4x32xf32>
      tpu.vector_store %arg7[%c0_49, %c0_50, %c0_51], %71 {strides = array<i32>} : memref<1x4x32xf32, #tpu.memory_space<vmem>>, vector<1x4x32xf32>,
    } else {
    }
    return
  }
  func.func @transform_0(%arg0: i32, %arg1: i32, %arg2: i32) -> (i32, i32, i32) {
    %c0_i32 = arith.constant 0 : i32
    %c0_i32_0 = arith.constant 0 : i32
    return %arg0, %arg1, %c0_i32 : i32, i32, i32
  }
  func.func @transform_1(%arg0: i32, %arg1: i32, %arg2: i32) -> (i32, i32, i32, i32) {
    %c0_i32 = arith.constant 0 : i32
    %c0_i32_0 = arith.constant 0 : i32
    return %arg0, %arg2, %arg1, %c0_i32 : i32, i32, i32, i32
  }
  func.func @transform_2(%arg0: i32, %arg1: i32, %arg2: i32) -> (i32, i32, i32, i32) {
    %c0_i32 = arith.constant 0 : i32
    %c0_i32_0 = arith.constant 0 : i32
    return %arg0, %arg2, %arg1, %c0_i32 : i32, i32, i32, i32
  }
  func.func @transform_3(%arg0: i32, %arg1: i32, %arg2: i32) -> (i32, i32, i32) {
    %c0_i32 = arith.constant 0 : i32
    %c0_i32_0 = arith.constant 0 : i32
    return %arg0, %arg2, %c0_i32 : i32, i32, i32
  }
  func.func @transform_4(%arg0: i32, %arg1: i32, %arg2: i32) -> (i32, i32, i32) {
    %c0_i32 = arith.constant 0 : i32
    %c0_i32_0 = arith.constant 0 : i32
    return %arg0, %arg1, %c0_i32 : i32, i32, i32
  }
  func.func @transform_5(%arg0: i32, %arg1: i32, %arg2: i32) -> (i32, i32, i32, i32) {
    %c0_i32 = arith.constant 0 : i32
    %c0_i32_0 = arith.constant 0 : i32
    %c0_i32_1 = arith.constant 0 : i32
    return %arg0, %arg1, %c0_i32, %c0_i32_0 : i32, i32, i32, i32
  }
  func.func @transform_6(%arg0: i32, %arg1: i32, %arg2: i32) -> (i32, i32, i32) {
    %c0_i32 = arith.constant 0 : i32
    %c0_i32_0 = arith.constant 0 : i32
    return %arg0, %arg1, %c0_i32 : i32, i32, i32
  }
}

</mosaic_0001>

<llo_original>
// kernel: tpu_custom_call.1
$region0: #{tpu_custom_call.1}
  #allocation0 [shape = 'u32[]', space=smem, size = 0x4, offset = 0x4, fixed_abs, tag = 'smem constant byte address 0x4 - core index']
  #allocation1 [shape = 'u32[144,128]{1,0:T(1,128)}', space=vmem, size = 0x12000, scoped, tag = 'internal scratch']
  %s0 = inlined_call_operand.vmem [shape: f32[2,4,32], index: 0, kind: input, shape index: {}]
  %s1 = inlined_call_operand.hbm [shape: f32[2,8,4,32], index: 1, kind: input, shape index: {}]
  %s2 = inlined_call_operand.hbm [shape: f32[2,8,4,32], index: 2, kind: input, shape index: {}]
  %s3 = inlined_call_operand.vmem [shape: f32[2,8,1], index: 3, kind: input, shape index: {}]
  %s4 = inlined_call_operand.hbm [shape: f32[2,4,32], index: 4, kind: output, shape index: {0}]
  %s5 = inlined_call_operand.hbm [shape: f32[2,4,32,32], index: 5, kind: output, shape index: {1}]
  %s6 = inlined_call_operand.hbm [shape: f32[2,4,32], index: 6, kind: output, shape index: {2}]
  %7 = xla_tuple %s4, %s5, %s6
  %s8 = sld [smem:[#allocation0]]
  $region81: #{tpu_custom_call.1} parent=0
    _
  %s10 = ssub.s32 1, %s8
  %s11 = scalar_select 0, %s10, %s8
  $region1: #{tpu_custom_call.1} parent=0
    #allocation2 [shape = 'u8[32768]{0}', space=vmem, size = 0x8000, scoped, tag = 'input window, operand 1']
    #allocation3 [shape = 's32[2]{0}', space=sflag, size = 0x8, scoped, tag = 'scoped memory for tpu_custom_call.1']
    #allocation4 [shape = 's32[2]{0}', space=sflag, size = 0x8, scoped, tag = 'scoped memory for tpu_custom_call.1']
    #allocation5 [shape = 'u8[32768]{0}', space=vmem, size = 0x8000, scoped, tag = 'input window, operand 2']
    #allocation6 [shape = 's32[2]{0}', space=sflag, size = 0x8, scoped, tag = 'scoped memory for tpu_custom_call.1']
    #allocation7 [shape = 'u8[4096]{0}', space=vmem, size = 0x1000, scoped, tag = 'output window, operand 0']
    #allocation8 [shape = 'u8[131072]{0}', space=vmem, size = 0x20000, scoped, tag = 'output window, operand 1']
    #allocation9 [shape = 's32[2]{0}', space=sflag, size = 0x8, scoped, tag = 'scoped memory for tpu_custom_call.1']
    #allocation10 [shape = 'u8[4096]{0}', space=vmem, size = 0x1000, scoped, tag = 'output window, operand 2']
    %12 = vsyncpa [#allocation3], 0
    %s13 = scalar_lea.sflag [#allocation3], 1
    %14 = vsyncpa %s13, 0
    %15 = vsyncpa [#allocation6], 0
    %s16 = scalar_lea.sflag [#allocation6], 1
    %17 = vsyncpa %s16, 0
    %18 = vsyncpa [#allocation4], 0
    %s19 = scalar_lea.sflag [#allocation4], 1
    %20 = vsyncpa %s19, 0
    %21 = vsyncpa [#allocation9], 0
    %s22 = scalar_lea.sflag [#allocation9], 1
    %23 = vsyncpa %s22, 0
    loop: start=0, step=1, limit=4
    $region2: #{tpu_custom_call.1} parent=1 // loop_pre_header
      _
    $region3: #{tpu_custom_call.1} parent=1 // loop_header
      %s25 = sphi 0, %s29
      %p26 = scmp.ge.s32.totalorder %s25, 4
      %s32 = sphi 0, %s51
      %s33 = sphi 0, %s47
      %s34 = sphi 0, %s43
      %s35 = sphi 0, %s32
      %s36 = sphi 0, %s33
      %s37 = sphi 0, %s34
      %s38 = sphi 0, %s35
      %s39 = sphi 0, %s36
      %s40 = sphi 0, %s37
      %s56 = sphi 0, %s58
      %s59 = sphi 0, %s56
      %s60 = sphi 0, %s59
      %s76 = sphi 0, %s60
      %s86 = sphi 0, %s88
      %s89 = sphi 0, %s86
      %s90 = sphi 0, %s89
      %s106 = sphi 0, %s90
      %s116 = sphi 0, %s118
      %s119 = sphi 0, %s116
      %s120 = sphi 0, %s119
      %s136 = sphi 0, %s120
      %s144 = sphi 0, %s146
      %s147 = sphi 0, %s144
      %s148 = sphi 0, %s147
      %s164 = sphi 0, %s148
      %s172 = sphi 0, %s174
      %s175 = sphi 0, %s172
      %s176 = sphi 0, %s175
      %s192 = sphi 0, %s176
      %s200 = sphi 0, %s202
      %s203 = sphi 0, %s200
      %s204 = sphi 0, %s203
      %s220 = sphi 0, %s204
      %s228 = sphi 0, %s230
      %s231 = sphi 0, %s228
      %s232 = sphi 0, %s231
      %s248 = sphi 0, %s232
    $region4: #{tpu_custom_call.1} parent=1 // loop_header_branch
      %28 = sbr.rel (%p26) target = $region8
    $region5: #{tpu_custom_call.1} parent=1 // loop_body
      %s30 = ssub.s32 %s25, 1
      %s31 = ssub.s32 %s25, 2
      %s41 = sadd.s32 1, %s34
      %p42 = scmp.ge.s32.totalorder %s41, 1
      %s43 = scalar_select %p42, 0, %s41
      %s44 = sadd.s32 1, %s33
      %s45 = scalar_select %p42, %s44, %s33
      %p46 = scmp.ge.s32.totalorder %s45, 1
      %s47 = scalar_select %p46, 0, %s45
      %s48 = sadd.s32 1, %s32
      %s49 = scalar_select %p46, %s48, %s32
      %p50 = scmp.ge.s32.totalorder %s49, 2
      %s51 = scalar_select %p50, 0, %s49
      %s52 = ssub.s32 %s32, %s51
      %s53 = ssub.s32 %s33, %s47
      %s54 = sor.u32 %s52, %s53
      %p55 = scmp.eq.s32.totalorder %s54, 0
      %s57 = sadd.s32 %s56, 1
      %s58 = scalar_select %p55, %s56, %s57
      %p61 = pneg %p55
      %p62 = scmp.eq.s32.totalorder %s25, 1
      %p63 = por %p61, %p62
      %p64 = scmp.ne.s32.totalorder %s56, %s59
      %p65 = scmp.eq.s32.totalorder %s25, 0
      %p66 = por %p64, %p65
      %p67 = scmp.ne.s32.totalorder %s56, %s59
      %p68 = scmp.eq.s32.totalorder %s30, 1
      %p69 = por %p67, %p68
      %p70 = scmp.ne.s32.totalorder %s59, %s60
      %p71 = scmp.eq.s32.totalorder %s30, 0
      %p72 = por %p70, %p71
      %p73 = scmp.ne.s32.totalorder %s59, %s60
      %p74 = scmp.eq.s32.totalorder %s31, 1
      %p75 = por %p73, %p74
      %p77 = scmp.ne.s32.totalorder %s60, %s76
      %p78 = scmp.eq.s32.totalorder %s31, 0
      %p79 = por %p77, %p78
      %s80 = ssub.s32 %s32, %s51
      %s81 = ssub.s32 %s34, %s43
      %s82 = sor.u32 %s80, %s81
      %s83 = ssub.s32 %s33, %s47
      %s84 = sor.u32 %s82, %s83
      %p85 = scmp.eq.s32.totalorder %s84, 0
      %s87 = sadd.s32 %s86, 1
      %s88 = scalar_select %p85, %s86, %s87
      %p91 = pneg %p85
      %p92 = scmp.eq.s32.totalorder %s25, 1
      %p93 = por %p91, %p92
      %p94 = scmp.ne.s32.totalorder %s86, %s89
      %p95 = scmp.eq.s32.totalorder %s25, 0
      %p96 = por %p94, %p95
      %p97 = scmp.ne.s32.totalorder %s86, %s89
      %p98 = scmp.eq.s32.totalorder %s30, 1
      %p99 = por %p97, %p98
      %p100 = scmp.ne.s32.totalorder %s89, %s90
      %p101 = scmp.eq.s32.totalorder %s30, 0
      %p102 = por %p100, %p101
      %p103 = scmp.ne.s32.totalorder %s89, %s90
      %p104 = scmp.eq.s32.totalorder %s31, 1
      %p105 = por %p103, %p104
      %p107 = scmp.ne.s32.totalorder %s90, %s106
      %p108 = scmp.eq.s32.totalorder %s31, 0
      %p109 = por %p107, %p108
      %s110 = ssub.s32 %s32, %s51
      %s111 = ssub.s32 %s34, %s43
      %s112 = sor.u32 %s110, %s111
      %s113 = ssub.s32 %s33, %s47
      %s114 = sor.u32 %s112, %s113
      %p115 = scmp.eq.s32.totalorder %s114, 0
      %s117 = sadd.s32 %s116, 1
      %s118 = scalar_select %p115, %s116, %s117
      %p121 = pneg %p115
      %p122 = scmp.eq.s32.totalorder %s25, 1
      %p123 = por %p121, %p122
      %p124 = scmp.ne.s32.totalorder %s116, %s119
      %p125 = scmp.eq.s32.totalorder %s25, 0
      %p126 = por %p124, %p125
      %p127 = scmp.ne.s32.totalorder %s116, %s119
      %p128 = scmp.eq.s32.totalorder %s30, 1
      %p129 = por %p127, %p128
      %p130 = scmp.ne.s32.totalorder %s119, %s120
      %p131 = scmp.eq.s32.totalorder %s30, 0
      %p132 = por %p130, %p131
      %p133 = scmp.ne.s32.totalorder %s119, %s120
      %p134 = scmp.eq.s32.totalorder %s31, 1
      %p135 = por %p133, %p134
      %p137 = scmp.ne.s32.totalorder %s120, %s136
      %p138 = scmp.eq.s32.totalorder %s31, 0
      %p139 = por %p137, %p138
      %s140 = ssub.s32 %s32, %s51
      %s141 = ssub.s32 %s34, %s43
      %s142 = sor.u32 %s140, %s141
      %p143 = scmp.eq.s32.totalorder %s142, 0
      %s145 = sadd.s32 %s144, 1
      %s146 = scalar_select %p143, %s144, %s145
      %p149 = pneg %p143
      %p150 = scmp.eq.s32.totalorder %s25, 1
      %p151 = por %p149, %p150
      %p152 = scmp.ne.s32.totalorder %s144, %s147
      %p153 = scmp.eq.s32.totalorder %s25, 0
      %p154 = por %p152, %p153
      %p155 = scmp.ne.s32.totalorder %s144, %s147
      %p156 = scmp.eq.s32.totalorder %s30, 1
      %p157 = por %p155, %p156
      %p158 = scmp.ne.s32.totalorder %s147, %s148
      %p159 = scmp.eq.s32.totalorder %s30, 0
      %p160 = por %p158, %p159
      %p161 = scmp.ne.s32.totalorder %s147, %s148
      %p162 = scmp.eq.s32.totalorder %s31, 1
      %p163 = por %p161, %p162
      %p165 = scmp.ne.s32.totalorder %s148, %s164
      %p166 = scmp.eq.s32.totalorder %s31, 0
      %p167 = por %p165, %p166
      %s168 = ssub.s32 %s32, %s51
      %s169 = ssub.s32 %s33, %s47
      %s170 = sor.u32 %s168, %s169
      %p171 = scmp.eq.s32.totalorder %s170, 0
      %s173 = sadd.s32 %s172, 1
      %s174 = scalar_select %p171, %s172, %s173
      %p177 = pneg %p171
      %p178 = scmp.eq.s32.totalorder %s25, 1
      %p179 = por %p177, %p178
      %p180 = scmp.ne.s32.totalorder %s172, %s175
      %p181 = scmp.eq.s32.totalorder %s25, 0
      %p182 = por %p180, %p181
      %p183 = scmp.ne.s32.totalorder %s172, %s175
      %p184 = scmp.eq.s32.totalorder %s30, 1
      %p185 = por %p183, %p184
      %p186 = scmp.ne.s32.totalorder %s175, %s176
      %p187 = scmp.eq.s32.totalorder %s30, 0
      %p188 = por %p186, %p187
      %p189 = scmp.ne.s32.totalorder %s175, %s176
      %p190 = scmp.eq.s32.totalorder %s31, 1
      %p191 = por %p189, %p190
      %p193 = scmp.ne.s32.totalorder %s176, %s192
      %p194 = scmp.eq.s32.totalorder %s31, 0
      %p195 = por %p193, %p194
      %s196 = ssub.s32 %s32, %s51
      %s197 = ssub.s32 %s33, %s47
      %s198 = sor.u32 %s196, %s197
      %p199 = scmp.eq.s32.totalorder %s198, 0
      %s201 = sadd.s32 %s200, 1
      %s202 = scalar_select %p199, %s200, %s201
      %p205 = pneg %p199
      %p206 = scmp.eq.s32.totalorder %s25, 1
      %p207 = por %p205, %p206
      %p208 = scmp.ne.s32.totalorder %s200, %s203
      %p209 = scmp.eq.s32.totalorder %s25, 0
      %p210 = por %p208, %p209
      %p211 = scmp.ne.s32.totalorder %s200, %s203
      %p212 = scmp.eq.s32.totalorder %s30, 1
      %p213 = por %p211, %p212
      %p214 = scmp.ne.s32.totalorder %s203, %s204
      %p215 = scmp.eq.s32.totalorder %s30, 0
      %p216 = por %p214, %p215
      %p217 = scmp.ne.s32.totalorder %s203, %s204
      %p218 = scmp.eq.s32.totalorder %s31, 1
      %p219 = por %p217, %p218
      %p221 = scmp.ne.s32.totalorder %s204, %s220
      %p222 = scmp.eq.s32.totalorder %s31, 0
      %p223 = por %p221, %p222
      %s224 = ssub.s32 %s32, %s51
      %s225 = ssub.s32 %s33, %s47
      %s226 = sor.u32 %s224, %s225
      %p227 = scmp.eq.s32.totalorder %s226, 0
      %s229 = sadd.s32 %s228, 1
      %s230 = scalar_select %p227, %s228, %s229
      %p233 = pneg %p227
      %p234 = scmp.eq.s32.totalorder %s25, 1
      %p235 = por %p233, %p234
      %p236 = scmp.ne.s32.totalorder %s228, %s231
      %p237 = scmp.eq.s32.totalorder %s25, 0
      %p238 = por %p236, %p237
      %p239 = scmp.ne.s32.totalorder %s228, %s231
      %p240 = scmp.eq.s32.totalorder %s30, 1
      %p241 = por %p239, %p240
      %p242 = scmp.ne.s32.totalorder %s231, %s232
      %p243 = scmp.eq.s32.totalorder %s30, 0
      %p244 = por %p242, %p243
      %p245 = scmp.ne.s32.totalorder %s231, %s232
      %p246 = scmp.eq.s32.totalorder %s31, 1
      %p247 = por %p245, %p246
      %p249 = scmp.ne.s32.totalorder %s232, %s248
      %p250 = scmp.eq.s32.totalorder %s31, 0
      %p251 = por %p249, %p250
      %p252 = scmp.le.s32.totalorder 1, %s25
      %p253 = scmp.lt.s32.totalorder %s25, 3
      %p254 = pnand %p252, %p253
      %p255 = pneg %p254
      // Predicated region
      $region9: #{tpu_custom_call.1} parent=5 // pred_check
        _
      $region10: #{tpu_custom_call.1} parent=5 // pred_check_branch
        %257 = sbr.rel (%p254) target = $region12
      $region11: #{tpu_custom_call.1} parent=5 // pred_region
        %s258 = ssub.s32 %s25, 1
      $region12: #{tpu_custom_call.1} parent=5 // pred_fallthru
        _
      %p259 = scmp.lt.s32.totalorder %s25, 2
      // Predicated region
      $region13: #{tpu_custom_call.1} parent=5 // pred_check
        %p260 = pneg %p259
      $region14: #{tpu_custom_call.1} parent=5 // pred_check_branch
        %262 = sbr.rel (%p260) target = $region16
      $region15: #{tpu_custom_call.1} parent=5 // pred_region
        // Predicated region
        $region17: #{tpu_custom_call.1} parent=15 // pred_check
          %p263 = pneg %p66
        $region18: #{tpu_custom_call.1} parent=15 // pred_check_branch
          %265 = sbr.rel (%p263) target = $region20
        $region19: #{tpu_custom_call.1} parent=15 // pred_region
          %p266 = scmp.lt.s32.totalorder %s32, 1
          %s267 = scalar_select %p266, %s32, 1
          %p268 = scmp.lt.s32.totalorder %s33, 0
          %s269 = scalar_select %p268, %s33, 0
          %s270 = sadd.s32 %s269, %s267
          %s271 = smul.addr %s270, 4
          %s272 = scalar_lea.vmem %s0, %s271
        $region20: #{tpu_custom_call.1} parent=15 // pred_fallthru
          _
        // Predicated region
        $region21: #{tpu_custom_call.1} parent=15 // pred_check
          %p273 = pneg %p96
        $region22: #{tpu_custom_call.1} parent=15 // pred_check_branch
          %275 = sbr.rel (%p273) target = $region24
        $region23: #{tpu_custom_call.1} parent=15 // pred_region
          %s276 = sand.u32 %s86, 1
          %s277 = scalar_lea.sflag [#allocation3], %s276
          %s278 = sand.u32 %s86, 1
          %s279 = smul.addr %s278, 32
          %s280 = scalar_lea.vmem [#allocation2], %s279
          %s281 = smul.u32 8, %s34
          %s283 = ssub.s32 512, 512
          %284 = vsyncadd %s277, %s283
          %s285 = sadd.s32 %s33, %s281
          %s286 = smul.addr %s32, 8
          %s287 = sadd.s32 %s285, %s286
          %s288 = smul.addr %s287, 64
          %s289 = scalar_lea.hbm %s1, %s288
          %s290 = sshll.u32 %s280, 4
          %s291 = int_to_ptr.vmem [resolvable:$true] %s290
          %296 = dma.hbm_to_vmem [thread:$0]  %s289, 512, %s291, %s277, 64, 64, 4
        $region24: #{tpu_custom_call.1} parent=15 // pred_fallthru
          _
        // Predicated region
        $region25: #{tpu_custom_call.1} parent=15 // pred_check
          %p297 = pneg %p126
        $region26: #{tpu_custom_call.1} parent=15 // pred_check_branch
          %299 = sbr.rel (%p297) target = $region28
        $region27: #{tpu_custom_call.1} parent=15 // pred_region
          %s300 = sand.u32 %s116, 1
          %s301 = scalar_lea.sflag [#allocation6], %s300
          %s302 = sand.u32 %s116, 1
          %s303 = smul.addr %s302, 32
          %s304 = scalar_lea.vmem [#allocation5], %s303
          %s305 = smul.u32 8, %s34
          %s307 = ssub.s32 512, 512
          %308 = vsyncadd %s301, %s307
          %s309 = sadd.s32 %s33, %s305
          %s310 = smul.addr %s32, 8
          %s311 = sadd.s32 %s309, %s310
          %s312 = smul.addr %s311, 64
          %s313 = scalar_lea.hbm %s2, %s312
          %s314 = sshll.u32 %s304, 4
          %s315 = int_to_ptr.vmem [resolvable:$true] %s314
          %320 = dma.hbm_to_vmem [thread:$0]  %s313, 512, %s315, %s301, 64, 64, 4
        $region28: #{tpu_custom_call.1} parent=15 // pred_fallthru
          _
        // Predicated region
        $region29: #{tpu_custom_call.1} parent=15 // pred_check
          %p321 = pneg %p154
        $region30: #{tpu_custom_call.1} parent=15 // pred_check_branch
          %323 = sbr.rel (%p321) target = $region32
        $region31: #{tpu_custom_call.1} parent=15 // pred_region
          %p324 = scmp.lt.s32.totalorder %s32, 1
          %s325 = scalar_select %p324, %s32, 1
          %p326 = scmp.lt.s32.totalorder %s34, 0
          %s327 = scalar_select %p326, %s34, 0
          %s328 = sadd.s32 %s327, %s325
          %s329 = smul.addr %s328, 8
          %s330 = scalar_lea.vmem %s3, %s329
        $region32: #{tpu_custom_call.1} parent=15 // pred_fallthru
          _
      $region16: #{tpu_custom_call.1} parent=5 // pred_fallthru
        _
      %p331 = scmp.le.s32.totalorder 1, %s25
      %p332 = scmp.lt.s32.totalorder %s25, 3
      %p333 = pnand %p331, %p332
      %p334 = pneg %p333
      // Predicated region
      $region33: #{tpu_custom_call.1} parent=5 // pred_check
        _
      $region34: #{tpu_custom_call.1} parent=5 // pred_check_branch
        %336 = sbr.rel (%p333) target = $region36
      $region35: #{tpu_custom_call.1} parent=5 // pred_region
        %s337 = ssub.s32 %s25, 1
        %s338 = sand.u32 %s89, 1
        %s339 = scalar_lea.sflag [#allocation3], %s338
        %s340 = sand.u32 %s89, 1
        %s341 = smul.addr %s340, 32
        %s342 = scalar_lea.vmem [#allocation2], %s341
        // Predicated region
        $region37: #{tpu_custom_call.1} parent=35 // pred_check
          %p343 = pneg %p102
        $region38: #{tpu_custom_call.1} parent=35 // pred_check_branch
          %345 = sbr.rel (%p343) target = $region40
        $region39: #{tpu_custom_call.1} parent=35 // pred_region
          %346 = dma.done %s339, 512
        $region40: #{tpu_custom_call.1} parent=35 // pred_fallthru
          _
        %s347 = sand.u32 %s119, 1
        %s348 = scalar_lea.sflag [#allocation6], %s347
        %s349 = sand.u32 %s119, 1
        %s350 = smul.addr %s349, 32
        %s351 = scalar_lea.vmem [#allocation5], %s350
        // Predicated region
        $region41: #{tpu_custom_call.1} parent=35 // pred_check
          %p352 = pneg %p132
        $region42: #{tpu_custom_call.1} parent=35 // pred_check_branch
          %354 = sbr.rel (%p352) target = $region44
        $region43: #{tpu_custom_call.1} parent=35 // pred_region
          %355 = dma.done %s348, 512
        $region44: #{tpu_custom_call.1} parent=35 // pred_fallthru
          _
        %p356 = scmp.lt.s32.totalorder %s35, 1
        %s357 = scalar_select %p356, %s35, 1
        %p358 = scmp.lt.s32.totalorder %s36, 0
        %s359 = scalar_select %p358, %s36, 0
        %s360 = sadd.s32 %s359, %s357
        %s361 = smul.addr %s360, 4
        %s362 = scalar_lea.vmem %s0, %s361
        %p363 = pneg %p72
        %p364 = pneg %p69
        %s365 = sand.u32 %s89, 1
        %s366 = scalar_lea.sflag [#allocation3], %s365
        %s367 = sand.u32 %s89, 1
        %s368 = smul.addr %s367, 32
        %s369 = scalar_lea.vmem [#allocation2], %s368
        %p370 = pneg %p102
        %p371 = pneg %p99
        %s372 = sand.u32 %s119, 1
        %s373 = scalar_lea.sflag [#allocation6], %s372
        %s374 = sand.u32 %s119, 1
        %s375 = smul.addr %s374, 32
        %s376 = scalar_lea.vmem [#allocation5], %s375
        %p377 = pneg %p132
        %p378 = pneg %p129
        %p379 = scmp.lt.s32.totalorder %s35, 1
        %s380 = scalar_select %p379, %s35, 1
        %p381 = scmp.lt.s32.totalorder %s37, 0
        %s382 = scalar_select %p381, %s37, 0
        %s383 = sadd.s32 %s382, %s380
        %s384 = smul.addr %s383, 8
        %s385 = scalar_lea.vmem %s3, %s384
        %p386 = pneg %p160
        %p387 = pneg %p157
        %p388 = pneg %p188
        %p389 = pneg %p185
        %s390 = sand.u32 %s175, 1
        %s391 = scalar_lea.sflag [#allocation4], %s390
        %s392 = sand.u32 %s175, 1
        %s393 = smul.addr %s392, 4
        %s394 = scalar_lea.vmem [#allocation7], %s393
        %p395 = pneg %p216
        %p396 = pneg %p213
        %s397 = sand.u32 %s30, 1
        %s398 = scalar_lea.sflag [#allocation9], %s397
        %s399 = sand.u32 %s203, 1
        %s400 = smul.addr %s399, 128
        %s401 = scalar_lea.vmem [#allocation8], %s400
        %p402 = pneg %p244
        %p403 = pneg %p241
        %s404 = sand.u32 %s30, 1
        %s405 = scalar_lea.sflag [#allocation9], %s404
        %s406 = sand.u32 %s231, 1
        %s407 = smul.addr %s406, 4
        %s408 = scalar_lea.vmem [#allocation10], %s407
        %p409 = scmp.lt.s32.totalorder %s35, 1
        %s410 = scalar_select %p409, %s35, 1
        %p411 = scmp.lt.s32.totalorder %s36, 0
        %s412 = scalar_select %p411, %s36, 0
        %s413 = sadd.s32 %s412, %s410
        %s414 = smul.addr %s413, 4
        %s415 = scalar_lea.vmem %s0, %s414
        %s416 = smul.u32 8, %s37
        %s417 = smul.u32 8, %s37
        %p418 = scmp.lt.s32.totalorder %s35, 1
        %s419 = scalar_select %p418, %s35, 1
        %p420 = scmp.lt.s32.totalorder %s37, 0
        %s421 = scalar_select %p420, %s37, 0
        %s422 = sadd.s32 %s421, %s419
        %s423 = smul.addr %s422, 8
        %s424 = scalar_lea.vmem %s3, %s423
        %s425 = smul.u32 4, %s36
        %p426 = scmp.eq.s32.totalorder %s37, 0
        // Predicated region
        $region45: #{tpu_custom_call.1} parent=35 // pred_check
          %p427 = pneg %p426
        $region46: #{tpu_custom_call.1} parent=35 // pred_check_branch
          %429 = sbr.rel (%p427) target = $region48
        $region47: #{tpu_custom_call.1} parent=35 // pred_region
          %vm430 = vcmask 261120
          %431 = vst.msk [vmem:[%s401] sm:$0xff] %vm430, 0.0
          %432 = vst.msk [vmem:[%s401 + $0x8] sm:$0xff] %vm430, 0.0
          %433 = vst.msk [vmem:[%s401 + $0x10] sm:$0xff] %vm430, 0.0
          %434 = vst.msk [vmem:[%s401 + $0x18] sm:$0xff] %vm430, 0.0
          %435 = vst.msk [vmem:[%s401 + $0x20] sm:$0xff] %vm430, 0.0
          %436 = vst.msk [vmem:[%s401 + $0x28] sm:$0xff] %vm430, 0.0
          %437 = vst.msk [vmem:[%s401 + $0x30] sm:$0xff] %vm430, 0.0
          %438 = vst.msk [vmem:[%s401 + $0x38] sm:$0xff] %vm430, 0.0
          %439 = vst.msk [vmem:[%s401 + $0x40] sm:$0xff] %vm430, 0.0
          %440 = vst.msk [vmem:[%s401 + $0x48] sm:$0xff] %vm430, 0.0
          %441 = vst.msk [vmem:[%s401 + $0x50] sm:$0xff] %vm430, 0.0
          %442 = vst.msk [vmem:[%s401 + $0x58] sm:$0xff] %vm430, 0.0
          %443 = vst.msk [vmem:[%s401 + $0x60] sm:$0xff] %vm430, 0.0
          %444 = vst.msk [vmem:[%s401 + $0x68] sm:$0xff] %vm430, 0.0
          %445 = vst.msk [vmem:[%s401 + $0x70] sm:$0xff] %vm430, 0.0
          %446 = vst.msk [vmem:[%s401 + $0x78] sm:$0xff] %vm430, 0.0
          %vm447 = vcmask 257024
          %448 = vst.msk [vmem:[%s408] sm:$0xf] %vm447, 0.0
        $region48: #{tpu_custom_call.1} parent=35 // pred_fallthru
          _
        %v449 = vld [vmem:[%s342] sm:$0xf]
        %v450 = vld [vmem:[%s342 + $0x4] sm:$0xf]
        %v451 = vld [vmem:[%s342 + $0x8] sm:$0xf]
        %v452 = vld [vmem:[%s342 + $0xc] sm:$0xf]
        %v453 = vld [vmem:[%s342 + $0x10] sm:$0xf]
        %v454 = vld [vmem:[%s342 + $0x14] sm:$0xf]
        %v455 = vld [vmem:[%s342 + $0x18] sm:$0xf]
        %v456 = vld [vmem:[%s342 + $0x1c] sm:$0xf]
        %v457 = vld [vmem:[%s351] sm:$0xf]
        %v458 = vld [vmem:[%s351 + $0x4] sm:$0xf]
        %v459 = vld [vmem:[%s351 + $0x8] sm:$0xf]
        %v460 = vld [vmem:[%s351 + $0xc] sm:$0xf]
        %v461 = vld [vmem:[%s351 + $0x10] sm:$0xf]
        %v462 = vld [vmem:[%s351 + $0x14] sm:$0xf]
        %v463 = vld [vmem:[%s351 + $0x18] sm:$0xf]
        %v464 = vld [vmem:[%s351 + $0x1c] sm:$0xf]
        %vm465 = vcmp.gt.f32.partialorder %v449, 0.0
        %vm466 = vcmp.gt.f32.partialorder %v450, 0.0
        %vm467 = vcmp.gt.f32.partialorder %v451, 0.0
        %vm468 = vcmp.gt.f32.partialorder %v452, 0.0
        %vm469 = vcmp.gt.f32.partialorder %v453, 0.0
        %vm470 = vcmp.gt.f32.partialorder %v454, 0.0
        %vm471 = vcmp.gt.f32.partialorder %v455, 0.0
        %vm472 = vcmp.gt.f32.partialorder %v456, 0.0
        %v473 = vadd.f32 %v449, 1.0
        %v474 = vadd.f32 %v450, 1.0
        %v475 = vadd.f32 %v451, 1.0
        %v476 = vadd.f32 %v452, 1.0
        %v477 = vadd.f32 %v453, 1.0
        %v478 = vadd.f32 %v454, 1.0
        %v479 = vadd.f32 %v455, 1.0
        %v480 = vadd.f32 %v456, 1.0
        %v481 = vmin.f32 %v449, 0.0
        %v482 = vmin.f32 %v450, 0.0
        %v483 = vmin.f32 %v451, 0.0
        %v484 = vmin.f32 %v452, 0.0
        %v485 = vmin.f32 %v453, 0.0
        %v486 = vmin.f32 %v454, 0.0
        %v487 = vmin.f32 %v455, 0.0
        %v488 = vmin.f32 %v456, 0.0
        %v489 = vmul.f32 %v481, 1.442695
        %v490 = vpow.pop %v489
        %v491 = vmul.f32 %v482, 1.442695
        %v492 = vpow.pop %v491
        %v493 = vmul.f32 %v483, 1.442695
        %v494 = vpow.pop %v493
        %v495 = vmul.f32 %v484, 1.442695
        %v496 = vpow.pop %v495
        %v497 = vmul.f32 %v485, 1.442695
        %v498 = vpow.pop %v497
        %v499 = vmul.f32 %v486, 1.442695
        %v500 = vpow.pop %v499
        %v501 = vmul.f32 %v487, 1.442695
        %v502 = vpow.pop %v501
        %v503 = vmul.f32 %v488, 1.442695
        %v504 = vpow.pop %v503
        %v505 = vsel %vm465, %v473, %v490
        %v506 = vsel %vm466, %v474, %v492
        %v507 = vsel %vm467, %v475, %v494
        %v508 = vsel %vm468, %v476, %v496
        %v509 = vsel %vm469, %v477, %v498
        %v510 = vsel %vm470, %v478, %v500
        %v511 = vsel %vm471, %v479, %v502
        %v512 = vsel %vm472, %v480, %v504
        %v513 = vld [vmem:[%s424] sm:$0xff]
        %v515 = vcombine.high %v513, %v513
        %v517 = vunpack.c.l.s4 1966171168
        %v518 = vunpack.c.0.s8 %v517
        %v519 = vlaneseq
        %v520 = vshrl.u32 %v519, 7
        %v521 = vsub.s32 %v518, %v520
        %v522 = vrot.slane %v513, %v521
        %v524 = vunpack.c.l.s4 1966171168
        %v525 = vunpack.c.0.s8 %v524
        %v526 = vlaneseq
        %v527 = vshrl.u32 %v526, 7
        %v528 = vsub.s32 %v525, %v527
        %v529 = vrot.slane %v515, %v528
        %v530 = vcombine.high %v522, %v522
        %v531 = vcombine.high %v529, %v529
        %v533 = vunpack.c.l.s4 1966171168
        %v534 = vunpack.c.0.s8 %v533
        %v535 = vlaneseq
        %v536 = vshrl.u32 %v535, 7
        %v537 = vsub.s32 %v534, %v536
        %v538 = vrot.slane %v522, %v537
        %v540 = vunpack.c.l.s4 1966171168
        %v541 = vunpack.c.0.s8 %v540
        %v542 = vlaneseq
        %v543 = vshrl.u32 %v542, 7
        %v544 = vsub.s32 %v541, %v543
        %v545 = vrot.slane %v529, %v544
        %v547 = vunpack.c.l.s4 1966171168
        %v548 = vunpack.c.0.s8 %v547
        %v549 = vlaneseq
        %v550 = vshrl.u32 %v549, 7
        %v551 = vsub.s32 %v548, %v550
        %v552 = vrot.slane %v530, %v551
        %v554 = vunpack.c.l.s4 1966171168
        %v555 = vunpack.c.0.s8 %v554
        %v556 = vlaneseq
        %v557 = vshrl.u32 %v556, 7
        %v558 = vsub.s32 %v555, %v557
        %v559 = vrot.slane %v531, %v558
        %v560 = vcombine.high %v538, %v538
        %v561 = vcombine.high %v545, %v545
        %v562 = vcombine.high %v552, %v552
        %v563 = vcombine.high %v559, %v559
        %vm572 = vcmp.gt.f32.partialorder %v538, 0.5
        %vm573 = vcmp.gt.f32.partialorder %v552, 0.5
        %vm574 = vcmp.gt.f32.partialorder %v560, 0.5
        %vm575 = vcmp.gt.f32.partialorder %v562, 0.5
        %vm576 = vcmp.gt.f32.partialorder %v545, 0.5
        %vm577 = vcmp.gt.f32.partialorder %v559, 0.5
        %vm578 = vcmp.gt.f32.partialorder %v561, 0.5
        %vm579 = vcmp.gt.f32.partialorder %v563, 0.5
        %v580 = vsel %vm572, 1, 0
        %v581 = vsel %vm573, 1, 0
        %v582 = vsel %vm574, 1, 0
        %v583 = vsel %vm575, 1, 0
        %v584 = vsel %vm576, 1, 0
        %v585 = vsel %vm577, 1, 0
        %v586 = vsel %vm578, 1, 0
        %v587 = vsel %vm579, 1, 0
        %v588 = vlaneseq
        %v589 = vshrl.u32 %v588, 7
        %v590 = vsub.s32 0, %v589
        %v591 = vrot.slane %v580, %v590
        %v592 = vlaneseq
        %v593 = vshrl.u32 %v592, 7
        %v594 = vsub.s32 0, %v593
        %v595 = vrot.slane %v581, %v594
        %v596 = vlaneseq
        %v597 = vshrl.u32 %v596, 7
        %v598 = vsub.s32 0, %v597
        %v599 = vrot.slane %v582, %v598
        %v600 = vlaneseq
        %v601 = vshrl.u32 %v600, 7
        %v602 = vsub.s32 0, %v601
        %v603 = vrot.slane %v583, %v602
        %v604 = vlaneseq
        %v605 = vshrl.u32 %v604, 7
        %v606 = vsub.s32 0, %v605
        %v607 = vrot.slane %v584, %v606
        %v608 = vlaneseq
        %v609 = vshrl.u32 %v608, 7
        %v610 = vsub.s32 0, %v609
        %v611 = vrot.slane %v585, %v610
        %v612 = vlaneseq
        %v613 = vshrl.u32 %v612, 7
        %v614 = vsub.s32 0, %v613
        %v615 = vrot.slane %v586, %v614
        %v616 = vlaneseq
        %v617 = vshrl.u32 %v616, 7
        %v618 = vsub.s32 0, %v617
        %v619 = vrot.slane %v587, %v618
        %620 = vset.pattern.permute.xlu0 0
        %621 = vperm.xlu0 %620, %v591
        %v622 = vpop.permute.xlu0 %621
        %623 = vset.pattern.permute.xlu0 0
        %624 = vperm.xlu0 %623, %v595
        %v625 = vpop.permute.xlu0 %624
        %626 = vset.pattern.permute.xlu0 0
        %627 = vperm.xlu0 %626, %v599
        %v628 = vpop.permute.xlu0 %627
        %629 = vset.pattern.permute.xlu0 0
        %630 = vperm.xlu0 %629, %v603
        %v631 = vpop.permute.xlu0 %630
        %632 = vset.pattern.permute.xlu0 0
        %633 = vperm.xlu0 %632, %v607
        %v634 = vpop.permute.xlu0 %633
        %635 = vset.pattern.permute.xlu0 0
        %636 = vperm.xlu0 %635, %v611
        %v637 = vpop.permute.xlu0 %636
        %638 = vset.pattern.permute.xlu0 0
        %639 = vperm.xlu0 %638, %v615
        %v640 = vpop.permute.xlu0 %639
        %641 = vset.pattern.permute.xlu0 0
        %642 = vperm.xlu0 %641, %v619
        %v643 = vpop.permute.xlu0 %642
        %vm644 = vcmp.eq.s32.totalorder %v622, 1
        %vm645 = vcmp.eq.s32.totalorder %v625, 1
        %vm646 = vcmp.eq.s32.totalorder %v628, 1
        %vm647 = vcmp.eq.s32.totalorder %v631, 1
        %vm648 = vcmp.eq.s32.totalorder %v634, 1
        %vm649 = vcmp.eq.s32.totalorder %v637, 1
        %vm650 = vcmp.eq.s32.totalorder %v640, 1
        %vm651 = vcmp.eq.s32.totalorder %v643, 1
        %v652 = vsel %vm644, 0.0, %v505
        %v653 = vsel %vm645, 0.0, %v506
        %v654 = vsel %vm646, 0.0, %v507
        %v655 = vsel %vm647, 0.0, %v508
        %v656 = vsel %vm648, 0.0, %v509
        %v657 = vsel %vm649, 0.0, %v510
        %v658 = vsel %vm650, 0.0, %v511
        %v659 = vsel %vm651, 0.0, %v512
        %v660 = vld [vmem:[%s408] sm:$0xf]
        %vm661 = vcmask 257024
        %v662 = vsel %vm661, %v652, 0.0
        %v663 = vsel %vm661, %v653, 0.0
        %v664 = vadd.f32 %v662, %v663
        %v665 = vsel %vm661, %v654, 0.0
        %v666 = vadd.f32 %v664, %v665
        %v667 = vsel %vm661, %v655, 0.0
        %v668 = vadd.f32 %v666, %v667
        %v669 = vsel %vm661, %v656, 0.0
        %v670 = vadd.f32 %v668, %v669
        %v671 = vsel %vm661, %v657, 0.0
        %v672 = vadd.f32 %v670, %v671
        %v673 = vsel %vm661, %v658, 0.0
        %v674 = vadd.f32 %v672, %v673
        %v675 = vsel %vm661, %v659, 0.0
        %v676 = vadd.f32 %v674, %v675
        %v677 = vadd.f32 %v660, %v676
        %678 = vst.msk [vmem:[%s408] sm:$0xf] %vm661, %v677
        %v679 = vcombine.low %v457, %v459
        %v681 = vunpack.c.l.s4 1983009808
        %v682 = vunpack.c.0.s8 %v681
        %v683 = vlaneseq
        %v684 = vshrl.u32 %v683, 7
        %v685 = vsub.s32 %v682, %v684
        %v686 = vrot.slane %v679, %v685
        %v687 = vcombine.low %v458, %v460
        %v689 = vunpack.c.l.s4 1983009808
        %v690 = vunpack.c.0.s8 %v689
        %v691 = vlaneseq
        %v692 = vshrl.u32 %v691, 7
        %v693 = vsub.s32 %v690, %v692
        %v694 = vrot.slane %v687, %v693
        %v695 = vcombine.low %v461, %v463
        %v697 = vunpack.c.l.s4 1983009808
        %v698 = vunpack.c.0.s8 %v697
        %v699 = vlaneseq
        %v700 = vshrl.u32 %v699, 7
        %v701 = vsub.s32 %v698, %v700
        %v702 = vrot.slane %v695, %v701
        %v703 = vcombine.low %v462, %v464
        %v705 = vunpack.c.l.s4 1983009808
        %v706 = vunpack.c.0.s8 %v705
        %v707 = vlaneseq
        %v708 = vshrl.u32 %v707, 7
        %v709 = vsub.s32 %v706, %v708
        %v710 = vrot.slane %v703, %v709
        %v711 = vcombine.low %v686, %v694
        %v712 = vcombine.high %v686, %v694
        %v714 = vunpack.c.l.s4 1934713408
        %v715 = vunpack.c.0.s8 %v714
        %v716 = vlaneseq
        %v717 = vshrl.u32 %v716, 7
        %v718 = vsub.s32 %v715, %v717
        %v719 = vrot.slane %v711, %v718
        %v721 = vunpack.c.l.s4 1934713408
        %v722 = vunpack.c.0.s8 %v721
        %v723 = vlaneseq
        %v724 = vshrl.u32 %v723, 7
        %v725 = vsub.s32 %v722, %v724
        %v726 = vrot.slane %v712, %v725
        %v727 = vcombine.low %v702, %v710
        %v728 = vcombine.high %v702, %v710
        %v730 = vunpack.c.l.s4 1934713408
        %v731 = vunpack.c.0.s8 %v730
        %v732 = vlaneseq
        %v733 = vshrl.u32 %v732, 7
        %v734 = vsub.s32 %v731, %v733
        %v735 = vrot.slane %v727, %v734
        %v737 = vunpack.c.l.s4 1934713408
        %v738 = vunpack.c.0.s8 %v737
        %v739 = vlaneseq
        %v740 = vshrl.u32 %v739, 7
        %v741 = vsub.s32 %v738, %v740
        %v742 = vrot.slane %v728, %v741
        %v743 = vcombine.low %v719, %v735
        %v744 = vcombine.high %v719, %v735
        %v745 = vcombine.low %v726, %v742
        %v746 = vcombine.high %v726, %v742
        %v747 = vcombine.low %v652, %v654
        %v749 = vunpack.c.l.s4 1983009808
        %v750 = vunpack.c.0.s8 %v749
        %v751 = vlaneseq
        %v752 = vshrl.u32 %v751, 7
        %v753 = vsub.s32 %v750, %v752
        %v754 = vrot.slane %v747, %v753
        %v755 = vcombine.low %v653, %v655
        %v757 = vunpack.c.l.s4 1983009808
        %v758 = vunpack.c.0.s8 %v757
        %v759 = vlaneseq
        %v760 = vshrl.u32 %v759, 7
        %v761 = vsub.s32 %v758, %v760
        %v762 = vrot.slane %v755, %v761
        %v763 = vcombine.low %v656, %v658
        %v765 = vunpack.c.l.s4 1983009808
        %v766 = vunpack.c.0.s8 %v765
        %v767 = vlaneseq
        %v768 = vshrl.u32 %v767, 7
        %v769 = vsub.s32 %v766, %v768
        %v770 = vrot.slane %v763, %v769
        %v771 = vcombine.low %v657, %v659
        %v773 = vunpack.c.l.s4 1983009808
        %v774 = vunpack.c.0.s8 %v773
        %v775 = vlaneseq
        %v776 = vshrl.u32 %v775, 7
        %v777 = vsub.s32 %v774, %v776
        %v778 = vrot.slane %v771, %v777
        %v779 = vcombine.low %v754, %v762
        %v780 = vcombine.high %v754, %v762
        %v782 = vunpack.c.l.s4 1934713408
        %v783 = vunpack.c.0.s8 %v782
        %v784 = vlaneseq
        %v785 = vshrl.u32 %v784, 7
        %v786 = vsub.s32 %v783, %v785
        %v787 = vrot.slane %v779, %v786
        %v789 = vunpack.c.l.s4 1934713408
        %v790 = vunpack.c.0.s8 %v789
        %v791 = vlaneseq
        %v792 = vshrl.u32 %v791, 7
        %v793 = vsub.s32 %v790, %v792
        %v794 = vrot.slane %v780, %v793
        %v795 = vcombine.low %v770, %v778
        %v796 = vcombine.high %v770, %v778
        %v798 = vunpack.c.l.s4 1934713408
        %v799 = vunpack.c.0.s8 %v798
        %v800 = vlaneseq
        %v801 = vshrl.u32 %v800, 7
        %v802 = vsub.s32 %v799, %v801
        %v803 = vrot.slane %v795, %v802
        %v805 = vunpack.c.l.s4 1934713408
        %v806 = vunpack.c.0.s8 %v805
        %v807 = vlaneseq
        %v808 = vshrl.u32 %v807, 7
        %v809 = vsub.s32 %v806, %v808
        %v810 = vrot.slane %v796, %v809
        %v811 = vcombine.low %v787, %v803
        %v812 = vcombine.high %v787, %v803
        %v813 = vcombine.low %v794, %v810
        %v814 = vcombine.high %v794, %v810
        %v815 = vld [vmem:[%s401] sm:$0xff]
        %v816 = vld [vmem:[%s401 + $0x8] sm:$0xff]
        %v817 = vld [vmem:[%s401 + $0x10] sm:$0xff]
        %v818 = vld [vmem:[%s401 + $0x18] sm:$0xff]
        %v819 = vld [vmem:[%s401 + $0x20] sm:$0xff]
        %v820 = vld [vmem:[%s401 + $0x28] sm:$0xff]
        %v821 = vld [vmem:[%s401 + $0x30] sm:$0xff]
        %v822 = vld [vmem:[%s401 + $0x38] sm:$0xff]
        %v823 = vld [vmem:[%s401 + $0x40] sm:$0xff]
        %v824 = vld [vmem:[%s401 + $0x48] sm:$0xff]
        %v825 = vld [vmem:[%s401 + $0x50] sm:$0xff]
        %v826 = vld [vmem:[%s401 + $0x58] sm:$0xff]
        %v827 = vld [vmem:[%s401 + $0x60] sm:$0xff]
        %v828 = vld [vmem:[%s401 + $0x68] sm:$0xff]
        %v829 = vld [vmem:[%s401 + $0x70] sm:$0xff]
        %v830 = vld [vmem:[%s401 + $0x78] sm:$0xff]
        %831 = vxpose.xlu0.b32.start [1/16] %v743, 128
        %832 = vxpose.xlu0.b32.cont [2/16] 0.0, 128
        %833 = vxpose.xlu0.b32.cont [3/16] 0.0, 128
        %834 = vxpose.xlu0.b32.cont [4/16] 0.0, 128
        %835 = vxpose.xlu0.b32.cont [5/16] 0.0, 128
        %836 = vxpose.xlu0.b32.cont [6/16] 0.0, 128
        %837 = vxpose.xlu0.b32.cont [7/16] 0.0, 128
        %838 = vxpose.xlu0.b32.cont [8/16] 0.0, 128
        %839 = vxpose.xlu0.b32.cont [9/16] 0.0, 128
        %840 = vxpose.xlu0.b32.cont [10/16] 0.0, 128
        %841 = vxpose.xlu0.b32.cont [11/16] 0.0, 128
        %842 = vxpose.xlu0.b32.cont [12/16] 0.0, 128
        %843 = vxpose.xlu0.b32.cont [13/16] 0.0, 128
        %844 = vxpose.xlu0.b32.cont [14/16] 0.0, 128
        %845 = vxpose.xlu0.b32.cont [15/16] 0.0, 128
        %846 = vxpose.xlu0.b32.end [16/16] 0.0, 128
        %v847 = vpop.trf.xlu0
        %v848 = vpop.trf.xlu0
        %v849 = vpop.trf.xlu0
        %v850 = vpop.trf.xlu0
        %v851 = vpop.trf.xlu0
        %v852 = vpop.trf.xlu0
        %v853 = vpop.trf.xlu0
        %v854 = vpop.trf.xlu0
        %v855 = vpop.trf.xlu0
        %v856 = vpop.trf.xlu0
        %v857 = vpop.trf.xlu0
        %v858 = vpop.trf.xlu0
        %v859 = vpop.trf.xlu0
        %v860 = vpop.trf.xlu0
        %v861 = vpop.trf.xlu0
        %v862 = vpop.trf.xlu0
        %vm863 = vcmask 64512
        %v865 = vsel %vm863, %v847, 0
        %v868 = vsel %vm863, %v848, 0
        %v871 = vsel %vm863, %v849, 0
        %v874 = vsel %vm863, %v850, 0
        %876 = vmatprep.subr.mxu0 0.0
        %877 = vmatpush1.msra.mxu0 0.0
        %878 = vmatprep.subr.mxu0 0.0
        %879 = vmatpush1.msra.mxu0 0.0
        %880 = vmatprep.subr.mxu0 0.0
        %881 = vmatpush1.msra.mxu0 0.0
        %882 = vmatprep.subr.mxu0 0.0
        %883 = vmatpush1.msra.mxu0 0.0
        %884 = vmatprep.subr.mxu0 0.0
        %885 = vmatpush1.msra.mxu0 0.0
        %886 = vmatprep.subr.mxu0 0.0
        %887 = vmatpush1.msra.mxu0 0.0
        %888 = vmatprep.subr.mxu0 0.0
        %889 = vmatpush1.msra.mxu0 0.0
        %890 = vmatprep.subr.mxu0 0.0
        %891 = vmatpush1.msra.mxu0 0.0
        %892 = vmatprep.subr.mxu0 0.0
        %893 = vmatpush1.msra.mxu0 0.0
        %894 = vmatprep.subr.mxu0 0.0
        %895 = vmatpush1.msra.mxu0 0.0
        %896 = vmatprep.subr.mxu0 0.0
        %897 = vmatpush1.msra.mxu0 0.0
        %898 = vmatprep.subr.mxu0 0.0
        %899 = vmatpush1.msra.mxu0 0.0
        %900 = vmatprep.subr.mxu0 0.0
        %901 = vmatpush1.msra.mxu0 0.0
        %902 = vmatprep.subr.mxu0 0.0
        %903 = vmatpush1.msra.mxu0 0.0
        %904 = vmatprep.subr.mxu0 0.0
        %905 = vmatpush1.msra.mxu0 0.0
        %906 = vmatprep.subr.mxu0 0.0
        %907 = vmatpush1.msra.mxu0 %v811
        %908 = vmatprep.subr.mxu0 0.0
        %909 = vmatpush2.msra.mxu0 0.0
        %910 = vmatprep.subr.mxu0 0.0
        %911 = vmatpush2.msra.mxu0 0.0
        %912 = vmatprep.subr.mxu0 0.0
        %913 = vmatpush2.msra.mxu0 0.0
        %914 = vmatprep.subr.mxu0 0.0
        %915 = vmatpush2.msra.mxu0 0.0
        %916 = vmatprep.subr.mxu0 0.0
        %917 = vmatpush2.msra.mxu0 0.0
        %918 = vmatprep.subr.mxu0 0.0
        %919 = vmatpush2.msra.mxu0 0.0
        %920 = vmatprep.subr.mxu0 0.0
        %921 = vmatpush2.msra.mxu0 0.0
        %922 = vmatprep.subr.mxu0 0.0
        %923 = vmatpush2.msra.mxu0 0.0
        %924 = vmatprep.subr.mxu0 0.0
        %925 = vmatpush2.msra.mxu0 0.0
        %926 = vmatprep.subr.mxu0 0.0
        %927 = vmatpush2.msra.mxu0 0.0
        %928 = vmatprep.subr.mxu0 0.0
        %929 = vmatpush2.msra.mxu0 0.0
        %930 = vmatprep.subr.mxu0 0.0
        %931 = vmatpush2.msra.mxu0 0.0
        %932 = vmatprep.subr.mxu0 0.0
        %933 = vmatpush2.msra.mxu0 0.0
        %934 = vmatprep.subr.mxu0 0.0
        %935 = vmatpush2.msra.mxu0 0.0
        %936 = vmatprep.subr.mxu0 0.0
        %937 = vmatpush2.msra.mxu0 0.0
        %938 = vmatprep.subr.mxu0 0.0
        %939 = vmatpush2.msra.mxu0 0.0
        %940 = vmatprep.mubr.f32.mxu0 0.0
        %941 = vmatmul.mubr.f32.gmra.mxu0 %v865
        %v942 = vpop.f32.mrf.mxu0
        %v943 = vadd.f32 0.0, %v942
        %v944 = vpop.f32.mrf.mxu0
        %945 = vmatprep.mubr.f32.mxu0 0.0
        %946 = vmatmul.mubr.f32.gmra.mxu0 %v868
        %v947 = vpop.f32.mrf.mxu0
        %v948 = vadd.f32 0.0, %v947
        %v949 = vpop.f32.mrf.mxu0
        %950 = vmatprep.mubr.f32.mxu0 0.0
        %951 = vmatmul.mubr.f32.gmra.mxu0 %v871
        %v952 = vpop.f32.mrf.mxu0
        %v953 = vadd.f32 0.0, %v952
        %v954 = vpop.f32.mrf.mxu0
        %955 = vmatprep.mubr.f32.mxu0 0.0
        %956 = vmatmul.mubr.f32.gmra.mxu0 %v874
        %v957 = vpop.f32.mrf.mxu0
        %v958 = vadd.f32 0.0, %v957
        %v959 = vpop.f32.mrf.mxu0
        %960 = vdwg.mxu0
        %961 = vxpose.xlu0.b32.start [1/16] %v744, 128
        %962 = vxpose.xlu0.b32.cont [2/16] 0.0, 128
        %963 = vxpose.xlu0.b32.cont [3/16] 0.0, 128
        %964 = vxpose.xlu0.b32.cont [4/16] 0.0, 128
        %965 = vxpose.xlu0.b32.cont [5/16] 0.0, 128
        %966 = vxpose.xlu0.b32.cont [6/16] 0.0, 128
        %967 = vxpose.xlu0.b32.cont [7/16] 0.0, 128
        %968 = vxpose.xlu0.b32.cont [8/16] 0.0, 128
        %969 = vxpose.xlu0.b32.cont [9/16] 0.0, 128
        %970 = vxpose.xlu0.b32.cont [10/16] 0.0, 128
        %971 = vxpose.xlu0.b32.cont [11/16] 0.0, 128
        %972 = vxpose.xlu0.b32.cont [12/16] 0.0, 128
        %973 = vxpose.xlu0.b32.cont [13/16] 0.0, 128
        %974 = vxpose.xlu0.b32.cont [14/16] 0.0, 128
        %975 = vxpose.xlu0.b32.cont [15/16] 0.0, 128
        %976 = vxpose.xlu0.b32.end [16/16] 0.0, 128
        %v977 = vpop.trf.xlu0
        %v978 = vpop.trf.xlu0
        %v979 = vpop.trf.xlu0
        %v980 = vpop.trf.xlu0
        %v981 = vpop.trf.xlu0
        %v982 = vpop.trf.xlu0
        %v983 = vpop.trf.xlu0
        %v984 = vpop.trf.xlu0
        %v985 = vpop.trf.xlu0
        %v986 = vpop.trf.xlu0
        %v987 = vpop.trf.xlu0
        %v988 = vpop.trf.xlu0
        %v989 = vpop.trf.xlu0
        %v990 = vpop.trf.xlu0
        %v991 = vpop.trf.xlu0
        %v992 = vpop.trf.xlu0
        %v994 = vsel %vm863, %v977, 0
        %v997 = vsel %vm863, %v978, 0
        %v1000 = vsel %vm863, %v979, 0
        %v1003 = vsel %vm863, %v980, 0
        %1005 = vmatprep.subr.mxu0 0.0
        %1006 = vmatpush1.msra.mxu0 0.0
        %1007 = vmatprep.subr.mxu0 0.0
        %1008 = vmatpush1.msra.mxu0 0.0
        %1009 = vmatprep.subr.mxu0 0.0
        %1010 = vmatpush1.msra.mxu0 0.0
        %1011 = vmatprep.subr.mxu0 0.0
        %1012 = vmatpush1.msra.mxu0 0.0
        %1013 = vmatprep.subr.mxu0 0.0
        %1014 = vmatpush1.msra.mxu0 0.0
        %1015 = vmatprep.subr.mxu0 0.0
        %1016 = vmatpush1.msra.mxu0 0.0
        %1017 = vmatprep.subr.mxu0 0.0
        %1018 = vmatpush1.msra.mxu0 0.0
        %1019 = vmatprep.subr.mxu0 0.0
        %1020 = vmatpush1.msra.mxu0 0.0
        %1021 = vmatprep.subr.mxu0 0.0
        %1022 = vmatpush1.msra.mxu0 0.0
        %1023 = vmatprep.subr.mxu0 0.0
        %1024 = vmatpush1.msra.mxu0 0.0
        %1025 = vmatprep.subr.mxu0 0.0
        %1026 = vmatpush1.msra.mxu0 0.0
        %1027 = vmatprep.subr.mxu0 0.0
        %1028 = vmatpush1.msra.mxu0 0.0
        %1029 = vmatprep.subr.mxu0 0.0
        %1030 = vmatpush1.msra.mxu0 0.0
        %1031 = vmatprep.subr.mxu0 0.0
        %1032 = vmatpush1.msra.mxu0 0.0
        %1033 = vmatprep.subr.mxu0 0.0
        %1034 = vmatpush1.msra.mxu0 0.0
        %1035 = vmatprep.subr.mxu0 0.0
        %1036 = vmatpush1.msra.mxu0 %v812
        %1037 = vmatprep.subr.mxu0 0.0
        %1038 = vmatpush2.msra.mxu0 0.0
        %1039 = vmatprep.subr.mxu0 0.0
        %1040 = vmatpush2.msra.mxu0 0.0
        %1041 = vmatprep.subr.mxu0 0.0
        %1042 = vmatpush2.msra.mxu0 0.0
        %1043 = vmatprep.subr.mxu0 0.0
        %1044 = vmatpush2.msra.mxu0 0.0
        %1045 = vmatprep.subr.mxu0 0.0
        %1046 = vmatpush2.msra.mxu0 0.0
        %1047 = vmatprep.subr.mxu0 0.0
        %1048 = vmatpush2.msra.mxu0 0.0
        %1049 = vmatprep.subr.mxu0 0.0
        %1050 = vmatpush2.msra.mxu0 0.0
        %1051 = vmatprep.subr.mxu0 0.0
        %1052 = vmatpush2.msra.mxu0 0.0
        %1053 = vmatprep.subr.mxu0 0.0
        %1054 = vmatpush2.msra.mxu0 0.0
        %1055 = vmatprep.subr.mxu0 0.0
        %1056 = vmatpush2.msra.mxu0 0.0
        %1057 = vmatprep.subr.mxu0 0.0
        %1058 = vmatpush2.msra.mxu0 0.0
        %1059 = vmatprep.subr.mxu0 0.0
        %1060 = vmatpush2.msra.mxu0 0.0
        %1061 = vmatprep.subr.mxu0 0.0
        %1062 = vmatpush2.msra.mxu0 0.0
        %1063 = vmatprep.subr.mxu0 0.0
        %1064 = vmatpush2.msra.mxu0 0.0
        %1065 = vmatprep.subr.mxu0 0.0
        %1066 = vmatpush2.msra.mxu0 0.0
        %1067 = vmatprep.subr.mxu0 0.0
        %1068 = vmatpush2.msra.mxu0 0.0
        %1069 = vmatprep.mubr.f32.mxu0 0.0
        %1070 = vmatmul.mubr.f32.gmra.mxu0 %v994
        %v1071 = vpop.f32.mrf.mxu0
        %v1072 = vadd.f32 0.0, %v1071
        %v1073 = vpop.f32.mrf.mxu0
        %1074 = vmatprep.mubr.f32.mxu0 0.0
        %1075 = vmatmul.mubr.f32.gmra.mxu0 %v997
        %v1076 = vpop.f32.mrf.mxu0
        %v1077 = vadd.f32 0.0, %v1076
        %v1078 = vpop.f32.mrf.mxu0
        %1079 = vmatprep.mubr.f32.mxu0 0.0
        %1080 = vmatmul.mubr.f32.gmra.mxu0 %v1000
        %v1081 = vpop.f32.mrf.mxu0
        %v1082 = vadd.f32 0.0, %v1081
        %v1083 = vpop.f32.mrf.mxu0
        %1084 = vmatprep.mubr.f32.mxu0 0.0
        %1085 = vmatmul.mubr.f32.gmra.mxu0 %v1003
        %v1086 = vpop.f32.mrf.mxu0
        %v1087 = vadd.f32 0.0, %v1086
        %v1088 = vpop.f32.mrf.mxu0
        %1089 = vdwg.mxu0
        %1090 = vxpose.xlu0.b32.start [1/16] %v745, 128
        %1091 = vxpose.xlu0.b32.cont [2/16] 0.0, 128
        %1092 = vxpose.xlu0.b32.cont [3/16] 0.0, 128
        %1093 = vxpose.xlu0.b32.cont [4/16] 0.0, 128
        %1094 = vxpose.xlu0.b32.cont [5/16] 0.0, 128
        %1095 = vxpose.xlu0.b32.cont [6/16] 0.0, 128
        %1096 = vxpose.xlu0.b32.cont [7/16] 0.0, 128
        %1097 = vxpose.xlu0.b32.cont [8/16] 0.0, 128
        %1098 = vxpose.xlu0.b32.cont [9/16] 0.0, 128
        %1099 = vxpose.xlu0.b32.cont [10/16] 0.0, 128
        %1100 = vxpose.xlu0.b32.cont [11/16] 0.0, 128
        %1101 = vxpose.xlu0.b32.cont [12/16] 0.0, 128
        %1102 = vxpose.xlu0.b32.cont [13/16] 0.0, 128
        %1103 = vxpose.xlu0.b32.cont [14/16] 0.0, 128
        %1104 = vxpose.xlu0.b32.cont [15/16] 0.0, 128
        %1105 = vxpose.xlu0.b32.end [16/16] 0.0, 128
        %v1106 = vpop.trf.xlu0
        %v1107 = vpop.trf.xlu0
        %v1108 = vpop.trf.xlu0
        %v1109 = vpop.trf.xlu0
        %v1110 = vpop.trf.xlu0
        %v1111 = vpop.trf.xlu0
        %v1112 = vpop.trf.xlu0
        %v1113 = vpop.trf.xlu0
        %v1114 = vpop.trf.xlu0
        %v1115 = vpop.trf.xlu0
        %v1116 = vpop.trf.xlu0
        %v1117 = vpop.trf.xlu0
        %v1118 = vpop.trf.xlu0
        %v1119 = vpop.trf.xlu0
        %v1120 = vpop.trf.xlu0
        %v1121 = vpop.trf.xlu0
        %v1123 = vsel %vm863, %v1106, 0
        %v1126 = vsel %vm863, %v1107, 0
        %v1129 = vsel %vm863, %v1108, 0
        %v1132 = vsel %vm863, %v1109, 0
        %1134 = vmatprep.subr.mxu0 0.0
        %1135 = vmatpush1.msra.mxu0 0.0
        %1136 = vmatprep.subr.mxu0 0.0
        %1137 = vmatpush1.msra.mxu0 0.0
        %1138 = vmatprep.subr.mxu0 0.0
        %1139 = vmatpush1.msra.mxu0 0.0
        %1140 = vmatprep.subr.mxu0 0.0
        %1141 = vmatpush1.msra.mxu0 0.0
        %1142 = vmatprep.subr.mxu0 0.0
        %1143 = vmatpush1.msra.mxu0 0.0
        %1144 = vmatprep.subr.mxu0 0.0
        %1145 = vmatpush1.msra.mxu0 0.0
        %1146 = vmatprep.subr.mxu0 0.0
        %1147 = vmatpush1.msra.mxu0 0.0
        %1148 = vmatprep.subr.mxu0 0.0
        %1149 = vmatpush1.msra.mxu0 0.0
        %1150 = vmatprep.subr.mxu0 0.0
        %1151 = vmatpush1.msra.mxu0 0.0
        %1152 = vmatprep.subr.mxu0 0.0
        %1153 = vmatpush1.msra.mxu0 0.0
        %1154 = vmatprep.subr.mxu0 0.0
        %1155 = vmatpush1.msra.mxu0 0.0
        %1156 = vmatprep.subr.mxu0 0.0
        %1157 = vmatpush1.msra.mxu0 0.0
        %1158 = vmatprep.subr.mxu0 0.0
        %1159 = vmatpush1.msra.mxu0 0.0
        %1160 = vmatprep.subr.mxu0 0.0
        %1161 = vmatpush1.msra.mxu0 0.0
        %1162 = vmatprep.subr.mxu0 0.0
        %1163 = vmatpush1.msra.mxu0 0.0
        %1164 = vmatprep.subr.mxu0 0.0
        %1165 = vmatpush1.msra.mxu0 %v813
        %1166 = vmatprep.subr.mxu0 0.0
        %1167 = vmatpush2.msra.mxu0 0.0
        %1168 = vmatprep.subr.mxu0 0.0
        %1169 = vmatpush2.msra.mxu0 0.0
        %1170 = vmatprep.subr.mxu0 0.0
        %1171 = vmatpush2.msra.mxu0 0.0
        %1172 = vmatprep.subr.mxu0 0.0
        %1173 = vmatpush2.msra.mxu0 0.0
        %1174 = vmatprep.subr.mxu0 0.0
        %1175 = vmatpush2.msra.mxu0 0.0
        %1176 = vmatprep.subr.mxu0 0.0
        %1177 = vmatpush2.msra.mxu0 0.0
        %1178 = vmatprep.subr.mxu0 0.0
        %1179 = vmatpush2.msra.mxu0 0.0
        %1180 = vmatprep.subr.mxu0 0.0
        %1181 = vmatpush2.msra.mxu0 0.0
        %1182 = vmatprep.subr.mxu0 0.0
        %1183 = vmatpush2.msra.mxu0 0.0
        %1184 = vmatprep.subr.mxu0 0.0
        %1185 = vmatpush2.msra.mxu0 0.0
        %1186 = vmatprep.subr.mxu0 0.0
        %1187 = vmatpush2.msra.mxu0 0.0
        %1188 = vmatprep.subr.mxu0 0.0
        %1189 = vmatpush2.msra.mxu0 0.0
        %1190 = vmatprep.subr.mxu0 0.0
        %1191 = vmatpush2.msra.mxu0 0.0
        %1192 = vmatprep.subr.mxu0 0.0
        %1193 = vmatpush2.msra.mxu0 0.0
        %1194 = vmatprep.subr.mxu0 0.0
        %1195 = vmatpush2.msra.mxu0 0.0
        %1196 = vmatprep.subr.mxu0 0.0
        %1197 = vmatpush2.msra.mxu0 0.0
        %1198 = vmatprep.mubr.f32.mxu0 0.0
        %1199 = vmatmul.mubr.f32.gmra.mxu0 %v1123
        %v1200 = vpop.f32.mrf.mxu0
        %v1201 = vadd.f32 0.0, %v1200
        %v1202 = vpop.f32.mrf.mxu0
        %1203 = vmatprep.mubr.f32.mxu0 0.0
        %1204 = vmatmul.mubr.f32.gmra.mxu0 %v1126
        %v1205 = vpop.f32.mrf.mxu0
        %v1206 = vadd.f32 0.0, %v1205
        %v1207 = vpop.f32.mrf.mxu0
        %1208 = vmatprep.mubr.f32.mxu0 0.0
        %1209 = vmatmul.mubr.f32.gmra.mxu0 %v1129
        %v1210 = vpop.f32.mrf.mxu0
        %v1211 = vadd.f32 0.0, %v1210
        %v1212 = vpop.f32.mrf.mxu0
        %1213 = vmatprep.mubr.f32.mxu0 0.0
        %1214 = vmatmul.mubr.f32.gmra.mxu0 %v1132
        %v1215 = vpop.f32.mrf.mxu0
        %v1216 = vadd.f32 0.0, %v1215
        %v1217 = vpop.f32.mrf.mxu0
        %1218 = vdwg.mxu0
        %1219 = vxpose.xlu0.b32.start [1/16] %v746, 128
        %1220 = vxpose.xlu0.b32.cont [2/16] 0.0, 128
        %1221 = vxpose.xlu0.b32.cont [3/16] 0.0, 128
        %1222 = vxpose.xlu0.b32.cont [4/16] 0.0, 128
        %1223 = vxpose.xlu0.b32.cont [5/16] 0.0, 128
        %1224 = vxpose.xlu0.b32.cont [6/16] 0.0, 128
        %1225 = vxpose.xlu0.b32.cont [7/16] 0.0, 128
        %1226 = vxpose.xlu0.b32.cont [8/16] 0.0, 128
        %1227 = vxpose.xlu0.b32.cont [9/16] 0.0, 128
        %1228 = vxpose.xlu0.b32.cont [10/16] 0.0, 128
        %1229 = vxpose.xlu0.b32.cont [11/16] 0.0, 128
        %1230 = vxpose.xlu0.b32.cont [12/16] 0.0, 128
        %1231 = vxpose.xlu0.b32.cont [13/16] 0.0, 128
        %1232 = vxpose.xlu0.b32.cont [14/16] 0.0, 128
        %1233 = vxpose.xlu0.b32.cont [15/16] 0.0, 128
        %1234 = vxpose.xlu0.b32.end [16/16] 0.0, 128
        %v1235 = vpop.trf.xlu0
        %v1236 = vpop.trf.xlu0
        %v1237 = vpop.trf.xlu0
        %v1238 = vpop.trf.xlu0
        %v1239 = vpop.trf.xlu0
        %v1240 = vpop.trf.xlu0
        %v1241 = vpop.trf.xlu0
        %v1242 = vpop.trf.xlu0
        %v1243 = vpop.trf.xlu0
        %v1244 = vpop.trf.xlu0
        %v1245 = vpop.trf.xlu0
        %v1246 = vpop.trf.xlu0
        %v1247 = vpop.trf.xlu0
        %v1248 = vpop.trf.xlu0
        %v1249 = vpop.trf.xlu0
        %v1250 = vpop.trf.xlu0
        %v1252 = vsel %vm863, %v1235, 0
        %v1255 = vsel %vm863, %v1236, 0
        %v1258 = vsel %vm863, %v1237, 0
        %v1261 = vsel %vm863, %v1238, 0
        %1263 = vmatprep.subr.mxu0 0.0
        %1264 = vmatpush1.msra.mxu0 0.0
        %1265 = vmatprep.subr.mxu0 0.0
        %1266 = vmatpush1.msra.mxu0 0.0
        %1267 = vmatprep.subr.mxu0 0.0
        %1268 = vmatpush1.msra.mxu0 0.0
        %1269 = vmatprep.subr.mxu0 0.0
        %1270 = vmatpush1.msra.mxu0 0.0
        %1271 = vmatprep.subr.mxu0 0.0
        %1272 = vmatpush1.msra.mxu0 0.0
        %1273 = vmatprep.subr.mxu0 0.0
        %1274 = vmatpush1.msra.mxu0 0.0
        %1275 = vmatprep.subr.mxu0 0.0
        %1276 = vmatpush1.msra.mxu0 0.0
        %1277 = vmatprep.subr.mxu0 0.0
        %1278 = vmatpush1.msra.mxu0 0.0
        %1279 = vmatprep.subr.mxu0 0.0
        %1280 = vmatpush1.msra.mxu0 0.0
        %1281 = vmatprep.subr.mxu0 0.0
        %1282 = vmatpush1.msra.mxu0 0.0
        %1283 = vmatprep.subr.mxu0 0.0
        %1284 = vmatpush1.msra.mxu0 0.0
        %1285 = vmatprep.subr.mxu0 0.0
        %1286 = vmatpush1.msra.mxu0 0.0
        %1287 = vmatprep.subr.mxu0 0.0
        %1288 = vmatpush1.msra.mxu0 0.0
        %1289 = vmatprep.subr.mxu0 0.0
        %1290 = vmatpush1.msra.mxu0 0.0
        %1291 = vmatprep.subr.mxu0 0.0
        %1292 = vmatpush1.msra.mxu0 0.0
        %1293 = vmatprep.subr.mxu0 0.0
        %1294 = vmatpush1.msra.mxu0 %v814
        %1295 = vmatprep.subr.mxu0 0.0
        %1296 = vmatpush2.msra.mxu0 0.0
        %1297 = vmatprep.subr.mxu0 0.0
        %1298 = vmatpush2.msra.mxu0 0.0
        %1299 = vmatprep.subr.mxu0 0.0
        %1300 = vmatpush2.msra.mxu0 0.0
        %1301 = vmatprep.subr.mxu0 0.0
        %1302 = vmatpush2.msra.mxu0 0.0
        %1303 = vmatprep.subr.mxu0 0.0
        %1304 = vmatpush2.msra.mxu0 0.0
        %1305 = vmatprep.subr.mxu0 0.0
        %1306 = vmatpush2.msra.mxu0 0.0
        %1307 = vmatprep.subr.mxu0 0.0
        %1308 = vmatpush2.msra.mxu0 0.0
        %1309 = vmatprep.subr.mxu0 0.0
        %1310 = vmatpush2.msra.mxu0 0.0
        %1311 = vmatprep.subr.mxu0 0.0
        %1312 = vmatpush2.msra.mxu0 0.0
        %1313 = vmatprep.subr.mxu0 0.0
        %1314 = vmatpush2.msra.mxu0 0.0
        %1315 = vmatprep.subr.mxu0 0.0
        %1316 = vmatpush2.msra.mxu0 0.0
        %1317 = vmatprep.subr.mxu0 0.0
        %1318 = vmatpush2.msra.mxu0 0.0
        %1319 = vmatprep.subr.mxu0 0.0
        %1320 = vmatpush2.msra.mxu0 0.0
        %1321 = vmatprep.subr.mxu0 0.0
        %1322 = vmatpush2.msra.mxu0 0.0
        %1323 = vmatprep.subr.mxu0 0.0
        %1324 = vmatpush2.msra.mxu0 0.0
        %1325 = vmatprep.subr.mxu0 0.0
        %1326 = vmatpush2.msra.mxu0 0.0
        %1327 = vmatprep.mubr.f32.mxu0 0.0
        %1328 = vmatmul.mubr.f32.gmra.mxu0 %v1252
        %v1329 = vpop.f32.mrf.mxu0
        %v1330 = vadd.f32 0.0, %v1329
        %v1331 = vpop.f32.mrf.mxu0
        %1332 = vmatprep.mubr.f32.mxu0 0.0
        %1333 = vmatmul.mubr.f32.gmra.mxu0 %v1255
        %v1334 = vpop.f32.mrf.mxu0
        %v1335 = vadd.f32 0.0, %v1334
        %v1336 = vpop.f32.mrf.mxu0
        %1337 = vmatprep.mubr.f32.mxu0 0.0
        %1338 = vmatmul.mubr.f32.gmra.mxu0 %v1258
        %v1339 = vpop.f32.mrf.mxu0
        %v1340 = vadd.f32 0.0, %v1339
        %v1341 = vpop.f32.mrf.mxu0
        %1342 = vmatprep.mubr.f32.mxu0 0.0
        %1343 = vmatmul.mubr.f32.gmra.mxu0 %v1261
        %v1344 = vpop.f32.mrf.mxu0
        %v1345 = vadd.f32 0.0, %v1344
        %v1346 = vpop.f32.mrf.mxu0
        %1347 = vdwg.mxu0
        %v1348 = vadd.f32 %v815, %v943
        %v1349 = vadd.f32 %v816, %v948
        %v1350 = vadd.f32 %v817, %v953
        %v1351 = vadd.f32 %v818, %v958
        %v1352 = vadd.f32 %v819, %v1072
        %v1353 = vadd.f32 %v820, %v1077
        %v1354 = vadd.f32 %v821, %v1082
        %v1355 = vadd.f32 %v822, %v1087
        %v1356 = vadd.f32 %v823, %v1201
        %v1357 = vadd.f32 %v824, %v1206
        %v1358 = vadd.f32 %v825, %v1211
        %v1359 = vadd.f32 %v826, %v1216
        %v1360 = vadd.f32 %v827, %v1330
        %v1361 = vadd.f32 %v828, %v1335
        %v1362 = vadd.f32 %v829, %v1340
        %v1363 = vadd.f32 %v830, %v1345
        %vm1364 = vcmask 261120
        %1365 = vst.msk [vmem:[%s401] sm:$0xff] %vm1364, %v1348
        %1366 = vst.msk [vmem:[%s401 + $0x8] sm:$0xff] %vm1364, %v1349
        %1367 = vst.msk [vmem:[%s401 + $0x10] sm:$0xff] %vm1364, %v1350
        %1368 = vst.msk [vmem:[%s401 + $0x18] sm:$0xff] %vm1364, %v1351
        %1369 = vst.msk [vmem:[%s401 + $0x20] sm:$0xff] %vm1364, %v1352
        %1370 = vst.msk [vmem:[%s401 + $0x28] sm:$0xff] %vm1364, %v1353
        %1371 = vst.msk [vmem:[%s401 + $0x30] sm:$0xff] %vm1364, %v1354
        %1372 = vst.msk [vmem:[%s401 + $0x38] sm:$0xff] %vm1364, %v1355
        %1373 = vst.msk [vmem:[%s401 + $0x40] sm:$0xff] %vm1364, %v1356
        %1374 = vst.msk [vmem:[%s401 + $0x48] sm:$0xff] %vm1364, %v1357
        %1375 = vst.msk [vmem:[%s401 + $0x50] sm:$0xff] %vm1364, %v1358
        %1376 = vst.msk [vmem:[%s401 + $0x58] sm:$0xff] %vm1364, %v1359
        %1377 = vst.msk [vmem:[%s401 + $0x60] sm:$0xff] %vm1364, %v1360
        %1378 = vst.msk [vmem:[%s401 + $0x68] sm:$0xff] %vm1364, %v1361
        %1379 = vst.msk [vmem:[%s401 + $0x70] sm:$0xff] %vm1364, %v1362
        %1380 = vst.msk [vmem:[%s401 + $0x78] sm:$0xff] %vm1364, %v1363
        // Predicated region
        $region49: #{tpu_custom_call.1} parent=35 // pred_check
          %p1381 = pneg %p426
        $region50: #{tpu_custom_call.1} parent=35 // pred_check_branch
          %1383 = sbr.rel (%p1381) target = $region52
        $region51: #{tpu_custom_call.1} parent=35 // pred_region
          %v1384 = vld [vmem:[%s415] sm:$0xf]
          %vm1385 = vcmp.gt.f32.partialorder %v1384, 0.0
          %v1386 = vadd.f32 %v1384, 1.0
          %v1387 = vmin.f32 %v1384, 0.0
          %v1388 = vmul.f32 %v1387, 1.442695
          %v1389 = vpow.pop %v1388
          %v1390 = vsel %vm1385, %v1386, %v1389
          %v1391 = vld [vmem:[%s401] sm:$0xff]
          %v1392 = vld [vmem:[%s401 + $0x8] sm:$0xff]
          %v1393 = vld [vmem:[%s401 + $0x10] sm:$0xff]
          %v1394 = vld [vmem:[%s401 + $0x18] sm:$0xff]
          %v1395 = vld [vmem:[%s401 + $0x20] sm:$0xff]
          %v1396 = vld [vmem:[%s401 + $0x28] sm:$0xff]
          %v1397 = vld [vmem:[%s401 + $0x30] sm:$0xff]
          %v1398 = vld [vmem:[%s401 + $0x38] sm:$0xff]
          %v1399 = vld [vmem:[%s401 + $0x40] sm:$0xff]
          %v1400 = vld [vmem:[%s401 + $0x48] sm:$0xff]
          %v1401 = vld [vmem:[%s401 + $0x50] sm:$0xff]
          %v1402 = vld [vmem:[%s401 + $0x58] sm:$0xff]
          %v1403 = vld [vmem:[%s401 + $0x60] sm:$0xff]
          %v1404 = vld [vmem:[%s401 + $0x68] sm:$0xff]
          %v1405 = vld [vmem:[%s401 + $0x70] sm:$0xff]
          %v1406 = vld [vmem:[%s401 + $0x78] sm:$0xff]
          %v1407 = vld [vmem:[%s408] sm:$0xf]
          %v1408 = vmul.f32 %v1390, %v1407
          %v1409 = vsel %vm661, %v1408, 0.0
          %1410 = vadd.xlane.f32.xlu0 %v1409
          %v1411 = vpop.xlane.xlu0 %1410
          %v1412 = vadd.f32 %v1411, 1e-06
          %v1413 = vrcp.pop %v1412
          %v1416 = vunpack.c.l.s4 1966171168
          %v1417 = vunpack.c.0.s8 %v1416
          %v1418 = vlaneseq
          %v1419 = vshrl.u32 %v1418, 7
          %v1420 = vsub.s32 %v1417, %v1419
          %v1421 = vrot.slane %v1390, %v1420
          %v1422 = vcombine.high %v1421, %v1421
          %v1424 = vunpack.c.l.s4 1966171168
          %v1425 = vunpack.c.0.s8 %v1424
          %v1426 = vlaneseq
          %v1427 = vshrl.u32 %v1426, 7
          %v1428 = vsub.s32 %v1425, %v1427
          %v1429 = vrot.slane %v1421, %v1428
          %v1431 = vunpack.c.l.s4 1966171168
          %v1432 = vunpack.c.0.s8 %v1431
          %v1433 = vlaneseq
          %v1434 = vshrl.u32 %v1433, 7
          %v1435 = vsub.s32 %v1432, %v1434
          %v1436 = vrot.slane %v1422, %v1435
          %v1437 = vcombine.high %v1429, %v1429
          %v1438 = vcombine.high %v1436, %v1436
          %v1439 = vlaneseq
          %v1440 = vshrl.u32 %v1439, 7
          %v1441 = vsub.s32 0, %v1440
          %v1442 = vrot.slane %v1429, %v1441
          %v1443 = vlaneseq
          %v1444 = vshrl.u32 %v1443, 7
          %v1445 = vsub.s32 0, %v1444
          %v1446 = vrot.slane %v1436, %v1445
          %v1447 = vlaneseq
          %v1448 = vshrl.u32 %v1447, 7
          %v1449 = vsub.s32 0, %v1448
          %v1450 = vrot.slane %v1437, %v1449
          %v1451 = vlaneseq
          %v1452 = vshrl.u32 %v1451, 7
          %v1453 = vsub.s32 0, %v1452
          %v1454 = vrot.slane %v1438, %v1453
          %v1459 = vmul.f32 %v1442, %v1391
          %v1460 = vmul.f32 %v1442, %v1392
          %v1461 = vmul.f32 %v1442, %v1393
          %v1462 = vmul.f32 %v1442, %v1394
          %v1463 = vmul.f32 %v1446, %v1395
          %v1464 = vmul.f32 %v1446, %v1396
          %v1465 = vmul.f32 %v1446, %v1397
          %v1466 = vmul.f32 %v1446, %v1398
          %v1467 = vmul.f32 %v1450, %v1399
          %v1468 = vmul.f32 %v1450, %v1400
          %v1469 = vmul.f32 %v1450, %v1401
          %v1470 = vmul.f32 %v1450, %v1402
          %v1471 = vmul.f32 %v1454, %v1403
          %v1472 = vmul.f32 %v1454, %v1404
          %v1473 = vmul.f32 %v1454, %v1405
          %v1474 = vmul.f32 %v1454, %v1406
          %v1475 = vsel %vm1364, %v1459, 0.0
          %1476 = vadd.xlane.f32.xlu0 %v1475
          %v1477 = vpop.xlane.xlu0 %1476
          %v1478 = vsel %vm1364, %v1460, 0.0
          %1479 = vadd.xlane.f32.xlu0 %v1478
          %v1480 = vpop.xlane.xlu0 %1479
          %v1481 = vsel %vm1364, %v1461, 0.0
          %1482 = vadd.xlane.f32.xlu0 %v1481
          %v1483 = vpop.xlane.xlu0 %1482
          %v1484 = vsel %vm1364, %v1462, 0.0
          %1485 = vadd.xlane.f32.xlu0 %v1484
          %v1486 = vpop.xlane.xlu0 %1485
          %v1487 = vsel %vm1364, %v1463, 0.0
          %1488 = vadd.xlane.f32.xlu0 %v1487
          %v1489 = vpop.xlane.xlu0 %1488
          %v1490 = vsel %vm1364, %v1464, 0.0
          %1491 = vadd.xlane.f32.xlu0 %v1490
          %v1492 = vpop.xlane.xlu0 %1491
          %v1493 = vsel %vm1364, %v1465, 0.0
          %1494 = vadd.xlane.f32.xlu0 %v1493
          %v1495 = vpop.xlane.xlu0 %1494
          %v1496 = vsel %vm1364, %v1466, 0.0
          %1497 = vadd.xlane.f32.xlu0 %v1496
          %v1498 = vpop.xlane.xlu0 %1497
          %v1499 = vsel %vm1364, %v1467, 0.0
          %1500 = vadd.xlane.f32.xlu0 %v1499
          %v1501 = vpop.xlane.xlu0 %1500
          %v1502 = vsel %vm1364, %v1468, 0.0
          %1503 = vadd.xlane.f32.xlu0 %v1502
          %v1504 = vpop.xlane.xlu0 %1503
          %v1505 = vsel %vm1364, %v1469, 0.0
          %1506 = vadd.xlane.f32.xlu0 %v1505
          %v1507 = vpop.xlane.xlu0 %1506
          %v1508 = vsel %vm1364, %v1470, 0.0
          %1509 = vadd.xlane.f32.xlu0 %v1508
          %v1510 = vpop.xlane.xlu0 %1509
          %v1511 = vsel %vm1364, %v1471, 0.0
          %1512 = vadd.xlane.f32.xlu0 %v1511
          %v1513 = vpop.xlane.xlu0 %1512
          %v1514 = vsel %vm1364, %v1472, 0.0
          %1515 = vadd.xlane.f32.xlu0 %v1514
          %v1516 = vpop.xlane.xlu0 %1515
          %v1517 = vsel %vm1364, %v1473, 0.0
          %1518 = vadd.xlane.f32.xlu0 %v1517
          %v1519 = vpop.xlane.xlu0 %1518
          %v1520 = vsel %vm1364, %v1474, 0.0
          %1521 = vadd.xlane.f32.xlu0 %v1520
          %v1522 = vpop.xlane.xlu0 %1521
          %v1524 = vlaneseq
          %v1525 = vshrl.u32 %v1524, 7
          %v1526 = vsub.s32 0, %v1525
          %v1527 = vrot.slane %v1413, %v1526
          %v1528 = vlaneseq
          %v1529 = vshrl.u32 %v1528, 7
          %v1530 = vsub.s32 1, %v1529
          %v1531 = vrot.slane %v1413, %v1530
          %v1532 = vlaneseq
          %v1533 = vshrl.u32 %v1532, 7
          %v1534 = vsub.s32 2, %v1533
          %v1535 = vrot.slane %v1413, %v1534
          %v1536 = vlaneseq
          %v1537 = vshrl.u32 %v1536, 7
          %v1538 = vsub.s32 3, %v1537
          %v1539 = vrot.slane %v1413, %v1538
          %v1544 = vmul.f32 %v1477, %v1527
          %v1545 = vmul.f32 %v1480, %v1527
          %v1546 = vmul.f32 %v1483, %v1527
          %v1547 = vmul.f32 %v1486, %v1527
          %v1548 = vmul.f32 %v1489, %v1531
          %v1549 = vmul.f32 %v1492, %v1531
          %v1550 = vmul.f32 %v1495, %v1531
          %v1551 = vmul.f32 %v1498, %v1531
          %v1552 = vmul.f32 %v1501, %v1535
          %v1553 = vmul.f32 %v1504, %v1535
          %v1554 = vmul.f32 %v1507, %v1535
          %v1555 = vmul.f32 %v1510, %v1535
          %v1556 = vmul.f32 %v1513, %v1539
          %v1557 = vmul.f32 %v1516, %v1539
          %v1558 = vmul.f32 %v1519, %v1539
          %v1559 = vmul.f32 %v1522, %v1539
          %1576 = vset.pattern.permute.xlu0 0
          %1577 = vperm.xlu0 %1576, %v1544
          %v1578 = vpop.permute.xlu0 %1577
          %1579 = vset.pattern.permute.xlu0 0
          %1580 = vperm.xlu0 %1579, %v1545
          %v1581 = vpop.permute.xlu0 %1580
          %1582 = vset.pattern.permute.xlu0 0
          %1583 = vperm.xlu0 %1582, %v1546
          %v1584 = vpop.permute.xlu0 %1583
          %1585 = vset.pattern.permute.xlu0 0
          %1586 = vperm.xlu0 %1585, %v1547
          %v1587 = vpop.permute.xlu0 %1586
          %1588 = vset.pattern.permute.xlu0 0
          %1589 = vperm.xlu0 %1588, %v1548
          %v1590 = vpop.permute.xlu0 %1589
          %1591 = vset.pattern.permute.xlu0 0
          %1592 = vperm.xlu0 %1591, %v1549
          %v1593 = vpop.permute.xlu0 %1592
          %1594 = vset.pattern.permute.xlu0 0
          %1595 = vperm.xlu0 %1594, %v1550
          %v1596 = vpop.permute.xlu0 %1595
          %1597 = vset.pattern.permute.xlu0 0
          %1598 = vperm.xlu0 %1597, %v1551
          %v1599 = vpop.permute.xlu0 %1598
          %1600 = vset.pattern.permute.xlu0 0
          %1601 = vperm.xlu0 %1600, %v1552
          %v1602 = vpop.permute.xlu0 %1601
          %1603 = vset.pattern.permute.xlu0 0
          %1604 = vperm.xlu0 %1603, %v1553
          %v1605 = vpop.permute.xlu0 %1604
          %1606 = vset.pattern.permute.xlu0 0
          %1607 = vperm.xlu0 %1606, %v1554
          %v1608 = vpop.permute.xlu0 %1607
          %1609 = vset.pattern.permute.xlu0 0
          %1610 = vperm.xlu0 %1609, %v1555
          %v1611 = vpop.permute.xlu0 %1610
          %1612 = vset.pattern.permute.xlu0 0
          %1613 = vperm.xlu0 %1612, %v1556
          %v1614 = vpop.permute.xlu0 %1613
          %1615 = vset.pattern.permute.xlu0 0
          %1616 = vperm.xlu0 %1615, %v1557
          %v1617 = vpop.permute.xlu0 %1616
          %1618 = vset.pattern.permute.xlu0 0
          %1619 = vperm.xlu0 %1618, %v1558
          %v1620 = vpop.permute.xlu0 %1619
          %1621 = vset.pattern.permute.xlu0 0
          %1622 = vperm.xlu0 %1621, %v1559
          %v1623 = vpop.permute.xlu0 %1622
          %v1624 = vlaneseq
          %v1625 = vand.u32 %v1624, 127
          %v1626 = vlaneseq
          %v1627 = vshrl.u32 %v1626, 7
          %v1628 = vsub.s32 %v1625, %v1627
          %v1629 = vrot.slane %v1578, %v1628
          %v1630 = vadd.s32 %v1625, 4294967288
          %v1631 = vlaneseq
          %v1632 = vshrl.u32 %v1631, 7
          %v1633 = vsub.s32 %v1630, %v1632
          %v1634 = vrot.slane %v1581, %v1633
          %vm1635 = vcmask 130112
          %v1636 = vsel %vm1635, %v1634, %v1629
          %v1637 = vadd.s32 %v1625, 4294967280
          %v1638 = vlaneseq
          %v1639 = vshrl.u32 %v1638, 7
          %v1640 = vsub.s32 %v1637, %v1639
          %v1641 = vrot.slane %v1584, %v1640
          %vm1642 = vcmask 195712
          %v1643 = vsel %vm1642, %v1641, %v1636
          %v1644 = vadd.s32 %v1625, 4294967272
          %v1645 = vlaneseq
          %v1646 = vshrl.u32 %v1645, 7
          %v1647 = vsub.s32 %v1644, %v1646
          %v1648 = vrot.slane %v1587, %v1647
          %vm1649 = vcmask 261312
          %v1650 = vsel %vm1649, %v1648, %v1643
          %v1651 = vlaneseq
          %v1652 = vshrl.u32 %v1651, 7
          %v1653 = vsub.s32 %v1625, %v1652
          %v1654 = vrot.slane %v1590, %v1653
          %v1655 = vlaneseq
          %v1656 = vshrl.u32 %v1655, 7
          %v1657 = vsub.s32 %v1630, %v1656
          %v1658 = vrot.slane %v1593, %v1657
          %v1659 = vsel %vm1635, %v1658, %v1654
          %v1660 = vlaneseq
          %v1661 = vshrl.u32 %v1660, 7
          %v1662 = vsub.s32 %v1637, %v1661
          %v1663 = vrot.slane %v1596, %v1662
          %v1664 = vsel %vm1642, %v1663, %v1659
          %v1665 = vlaneseq
          %v1666 = vshrl.u32 %v1665, 7
          %v1667 = vsub.s32 %v1644, %v1666
          %v1668 = vrot.slane %v1599, %v1667
          %v1669 = vsel %vm1649, %v1668, %v1664
          %v1670 = vlaneseq
          %v1671 = vshrl.u32 %v1670, 7
          %v1672 = vsub.s32 %v1625, %v1671
          %v1673 = vrot.slane %v1602, %v1672
          %v1674 = vlaneseq
          %v1675 = vshrl.u32 %v1674, 7
          %v1676 = vsub.s32 %v1630, %v1675
          %v1677 = vrot.slane %v1605, %v1676
          %v1678 = vsel %vm1635, %v1677, %v1673
          %v1679 = vlaneseq
          %v1680 = vshrl.u32 %v1679, 7
          %v1681 = vsub.s32 %v1637, %v1680
          %v1682 = vrot.slane %v1608, %v1681
          %v1683 = vsel %vm1642, %v1682, %v1678
          %v1684 = vlaneseq
          %v1685 = vshrl.u32 %v1684, 7
          %v1686 = vsub.s32 %v1644, %v1685
          %v1687 = vrot.slane %v1611, %v1686
          %v1688 = vsel %vm1649, %v1687, %v1683
          %v1689 = vlaneseq
          %v1690 = vshrl.u32 %v1689, 7
          %v1691 = vsub.s32 %v1625, %v1690
          %v1692 = vrot.slane %v1614, %v1691
          %v1693 = vlaneseq
          %v1694 = vshrl.u32 %v1693, 7
          %v1695 = vsub.s32 %v1630, %v1694
          %v1696 = vrot.slane %v1617, %v1695
          %v1697 = vsel %vm1635, %v1696, %v1692
          %v1698 = vlaneseq
          %v1699 = vshrl.u32 %v1698, 7
          %v1700 = vsub.s32 %v1637, %v1699
          %v1701 = vrot.slane %v1620, %v1700
          %v1702 = vsel %vm1642, %v1701, %v1697
          %v1703 = vlaneseq
          %v1704 = vshrl.u32 %v1703, 7
          %v1705 = vsub.s32 %v1644, %v1704
          %v1706 = vrot.slane %v1623, %v1705
          %v1707 = vsel %vm1649, %v1706, %v1702
          %vm1708 = vcmask 1041409
          %v1709 = vsel %vm1708, %v1669, %v1650
          %vm1710 = vcmask 1042434
          %v1711 = vsel %vm1710, %v1688, %v1709
          %vm1712 = vcmask 1043459
          %v1713 = vsel %vm1712, %v1707, %v1711
          %1715 = vst.msk [vmem:[%s394] sm:$0xf] %vm661, %v1713
        $region52: #{tpu_custom_call.1} parent=35 // pred_fallthru
          _
        %s1716 = sand.u32 %s175, 1
        %s1717 = scalar_lea.sflag [#allocation4], %s1716
        %s1718 = sand.u32 %s175, 1
        %s1719 = smul.addr %s1718, 4
        %s1720 = scalar_lea.vmem [#allocation7], %s1719
        %s1721 = sand.u32 %s30, 1
        %s1722 = scalar_lea.sflag [#allocation9], %s1721
        %s1723 = sand.u32 %s203, 1
        %s1724 = smul.addr %s1723, 128
        %s1725 = scalar_lea.vmem [#allocation8], %s1724
        %s1726 = sand.u32 %s30, 1
        %s1727 = scalar_lea.sflag [#allocation9], %s1726
        %s1728 = sand.u32 %s231, 1
        %s1729 = smul.addr %s1728, 4
        %s1730 = scalar_lea.vmem [#allocation10], %s1729
        // Predicated region
        $region53: #{tpu_custom_call.1} parent=35 // pred_check
          %p1731 = pneg %p185
        $region54: #{tpu_custom_call.1} parent=35 // pred_check_branch
          %1733 = sbr.rel (%p1731) target = $region56
        $region55: #{tpu_custom_call.1} parent=35 // pred_region
          %s1735 = ssub.s32 64, 64
          %1736 = vsyncadd %s1717, %s1735
          %s1737 = sadd.s32 %s36, %s35
          %s1738 = smul.addr %s1737, 64
          %s1739 = scalar_lea.hbm %s4, %s1738
          %s1741 = sshll.u32 %s1720, 4
          %s1742 = int_to_ptr.vmem [resolvable:$true] %s1741
          %1744 = dma.vmem_to_hbm [thread:$0]  %s1742, 64, %s1739, %s1717
        $region56: #{tpu_custom_call.1} parent=35 // pred_fallthru
          _
        // Predicated region
        $region57: #{tpu_custom_call.1} parent=35 // pred_check
          %p1745 = pneg %p213
        $region58: #{tpu_custom_call.1} parent=35 // pred_check_branch
          %1747 = sbr.rel (%p1745) target = $region60
        $region59: #{tpu_custom_call.1} parent=35 // pred_region
          %s1748 = smul.u32 4, %s36
          %s1750 = ssub.s32 2048, 2048
          %1751 = vsyncadd %s1722, %s1750
          %s1752 = smul.addr %s1748, 4
          %s1753 = smul.addr %s35, 16
          %s1754 = sadd.s32 %s1752, %s1753
          %s1755 = smul.addr %s1754, 128
          %s1756 = scalar_lea.hbm %s5, %s1755
          %s1757 = sshll.u32 %s1725, 4
          %s1758 = int_to_ptr.vmem [resolvable:$true] %s1757
          %1763 = dma.vmem_to_hbm [thread:$0]  %s1758, 2048, %s1756, %s1722, 128, 128, 8
        $region60: #{tpu_custom_call.1} parent=35 // pred_fallthru
          _
        // Predicated region
        $region61: #{tpu_custom_call.1} parent=35 // pred_check
          %p1764 = pneg %p241
        $region62: #{tpu_custom_call.1} parent=35 // pred_check_branch
          %1766 = sbr.rel (%p1764) target = $region64
        $region63: #{tpu_custom_call.1} parent=35 // pred_region
          %s1768 = ssub.s32 64, 64
          %1769 = vsyncadd %s1727, %s1768
          %s1770 = sadd.s32 %s36, %s35
          %s1771 = smul.addr %s1770, 64
          %s1772 = scalar_lea.hbm %s6, %s1771
          %s1774 = sshll.u32 %s1730, 4
          %s1775 = int_to_ptr.vmem [resolvable:$true] %s1774
          %1777 = dma.vmem_to_hbm [thread:$0]  %s1775, 64, %s1772, %s1727
        $region64: #{tpu_custom_call.1} parent=35 // pred_fallthru
          _
      $region36: #{tpu_custom_call.1} parent=5 // pred_fallthru
        _
      %p1778 = scmp.le.s32.totalorder 2, %s25
      // Predicated region
      $region65: #{tpu_custom_call.1} parent=5 // pred_check
        %p1779 = pneg %p1778
      $region66: #{tpu_custom_call.1} parent=5 // pred_check_branch
        %1781 = sbr.rel (%p1779) target = $region68
      $region67: #{tpu_custom_call.1} parent=5 // pred_region
        %s1782 = ssub.s32 %s25, 2
        // Predicated region
        $region69: #{tpu_custom_call.1} parent=67 // pred_check
          %p1783 = pneg %p191
        $region70: #{tpu_custom_call.1} parent=67 // pred_check_branch
          %1785 = sbr.rel (%p1783) target = $region72
        $region71: #{tpu_custom_call.1} parent=67 // pred_region
          %s1786 = sand.u32 %s176, 1
          %s1787 = scalar_lea.sflag [#allocation4], %s1786
          %s1788 = sand.u32 %s176, 1
          %s1789 = smul.addr %s1788, 4
          %s1790 = scalar_lea.vmem [#allocation7], %s1789
          %1791 = dma.done %s1787, 64
        $region72: #{tpu_custom_call.1} parent=67 // pred_fallthru
          _
        // Predicated region
        $region73: #{tpu_custom_call.1} parent=67 // pred_check
          %p1792 = pneg %p219
        $region74: #{tpu_custom_call.1} parent=67 // pred_check_branch
          %1794 = sbr.rel (%p1792) target = $region76
        $region75: #{tpu_custom_call.1} parent=67 // pred_region
          %s1795 = sand.u32 %s31, 1
          %s1796 = scalar_lea.sflag [#allocation9], %s1795
          %s1797 = sand.u32 %s204, 1
          %s1798 = smul.addr %s1797, 128
          %s1799 = scalar_lea.vmem [#allocation8], %s1798
          %1800 = dma.done %s1796, 2048
        $region76: #{tpu_custom_call.1} parent=67 // pred_fallthru
          _
        // Predicated region
        $region77: #{tpu_custom_call.1} parent=67 // pred_check
          %p1801 = pneg %p247
        $region78: #{tpu_custom_call.1} parent=67 // pred_check_branch
          %1803 = sbr.rel (%p1801) target = $region80
        $region79: #{tpu_custom_call.1} parent=67 // pred_region
          %s1804 = sand.u32 %s31, 1
          %s1805 = scalar_lea.sflag [#allocation9], %s1804
          %s1806 = sand.u32 %s232, 1
          %s1807 = smul.addr %s1806, 4
          %s1808 = scalar_lea.vmem [#allocation10], %s1807
          %1809 = dma.done %s1805, 64
        $region80: #{tpu_custom_call.1} parent=67 // pred_fallthru
          _
      $region68: #{tpu_custom_call.1} parent=5 // pred_fallthru
        _
    $region6: #{tpu_custom_call.1} parent=1 // loop_footer
      %s29 = sadd.s32 1, %s25
    $region7: #{tpu_custom_call.1} parent=1 // loop_footer_branch
      %24 = sbr.rel target = $region3
    $region8: #{tpu_custom_call.1} parent=1 // loop_exit
      _
    %1810 = vsyncpa [#allocation3], 1
    %s1811 = scalar_lea.sflag [#allocation3], 1
    %1812 = vsyncpa %s1811, 1
    %1813 = vsyncpa [#allocation6], 1
    %s1814 = scalar_lea.sflag [#allocation6], 1
    %1815 = vsyncpa %s1814, 1
    %1816 = vsyncpa [#allocation4], 1
    %s1817 = scalar_lea.sflag [#allocation4], 1
    %1818 = vsyncpa %s1817, 1
    %1819 = vsyncpa [#allocation9], 1
    %s1820 = scalar_lea.sflag [#allocation9], 1
    %1821 = vsyncpa %s1820, 1

</llo_original>
